<compile_context>
chip_gen: v7x
topology: tpu7x:2x2x1
jax: 0.10.0
libtpu: 0.0.40
codegen_flags: <defaults>
</compile_context>

<pallas_src>
import numpy as np

import jax
import jax.numpy as jnp
from jax.experimental import pallas as pl
from jax.experimental.pallas import tpu as pltpu


# ---------------------------------------------------------------------------
# Fused Pallas kernel: the entire TeacherModel forward (4 matmuls, VMEM resident)
# ---------------------------------------------------------------------------
def _teacher_fused_kernel(x_ref, k1_ref, k2_ref, k35_ref, k5_ref, b_ref, o_ref):
    def dense(a_bf16, w_ref, bias, leaky_slope):
        # bf16 MXU operands, f32 accumulation; bias + LeakyReLU in f32 on the VPU.
        acc = jnp.dot(a_bf16, w_ref[...], preferred_element_type=jnp.float32)
        acc = acc + bias                              # (1, N) bias broadcast
        if leaky_slope is not None:
            acc = jnp.where(acc > 0, acc, leaky_slope * acc)
        return acc

    a = x_ref[...]                                                       # [TB, 16] bf16
    a = dense(a, k1_ref, b_ref[0:1, :288], 0.2).astype(jnp.bfloat16)     # conv1+LReLU  -> [TB, 288]
    a = dense(a, k2_ref, b_ref[1:2, :576], 0.2).astype(jnp.bfloat16)     # conv2+LReLU  -> [TB, 576]
    a = dense(a, k35_ref, b_ref[2:3, :640], 0.2).astype(jnp.bfloat16)    # conv3*fc1+LReLU -> [TB, 640]
    a = dense(a, k5_ref, b_ref[3:4, :128], None)                         # fc2 logits   -> [TB, 128] f32
    o_ref[...] = a.astype(o_ref.dtype)


# ---------------------------------------------------------------------------
# One-time parameter packing (host-side, run once; NOT on the forward hot path)
# ---------------------------------------------------------------------------
def pack_params(params):
    """Pre-transpose / unroll / permute / fold / pad all weights into kernel-ready form."""
    w1 = np.asarray(params["conv1_w"], np.float32)   # [32, 1, 4, 4]
    b1 = np.asarray(params["conv1_b"], np.float32)   # [32]
    w2 = np.asarray(params["conv2_w"], np.float32)   # [64, 32, 3, 3]
    b2 = np.asarray(params["conv2_b"], np.float32)   # [64]
    w3 = np.asarray(params["conv3_w"], np.float32)   # [128, 64, 3, 3]
    b3 = np.asarray(params["conv3_b"], np.float32)   # [128]
    fw1 = np.asarray(params["fc1_w"], np.float32)    # [625, 1152]
    fb1 = np.asarray(params["fc1_b"], np.float32)    # [625]
    fw2 = np.asarray(params["fc2_w"], np.float32)    # [10, 625]
    fb2 = np.asarray(params["fc2_b"], np.float32)    # [10]

    HI = 4          # conv1 input spatial
    HO = 3          # conv1/2/3 output spatial
    C1, C2, C3 = 32, 64, 128

    # conv1 (k=4, pad=1) unrolled: rows = input pixel (yi*4+xi), cols = (yo*3+xo)*32 + co.
    # Zero padding is encoded by the absent (zero) taps.
    K1 = np.zeros((HI * HI, HO * HO * C1), np.float32)
    for yo in range(HO):
        for xo in range(HO):
            col0 = (yo * HO + xo) * C1
            for i in range(4):
                for j in range(4):
                    yi, xi = yo + i - 1, xo + j - 1
                    if 0 <= yi < HI and 0 <= xi < HI:
                        K1[yi * HI + xi, col0:col0 + C1] = w1[:, 0, i, j]

    def conv3x3_as_matmul(w, cin, cout):
        # [9*cin, 9*cout]; rows = (yx_in)*cin + ci, cols = (yx_out)*cout + co.
        K = np.zeros((HO * HO * cin, HO * HO * cout), np.float32)
        for yo in range(HO):
            for xo in range(HO):
                col0 = (yo * HO + xo) * cout
                for i in range(3):
                    for j in range(3):
                        yi, xi = yo + i - 1, xo + j - 1
                        if 0 <= yi < HO and 0 <= xi < HO:
                            row0 = (yi * HO + xi) * cin
                            K[row0:row0 + cin, col0:col0 + cout] = w[:, :, i, j].T
        return K

    K2 = conv3x3_as_matmul(w2, C1, C2)   # [288, 576]
    K3 = conv3x3_as_matmul(w3, C2, C3)   # [576, 1152]

    # fc1: fold the PyTorch NCHW flatten (feature order (c, yx)) into a row permutation of
    # fc1_w, since our activations use feature order (yx, c).  Pad N 625 -> 640.
    NP1 = 640
    Wp1 = np.zeros((HO * HO * C3, NP1), np.float32)
    Wp1[:, :625] = fw1.reshape(625, C3, HO * HO).transpose(2, 1, 0).reshape(HO * HO * C3, 625)

    # Fold conv3 into fc1 (no nonlinearity between them -> exact).  Bias folds through too.
    K35 = K3 @ Wp1                                   # [576, 640]
    b35 = np.tile(b3, HO * HO) @ Wp1                 # conv3 bias pushed through fc1
    b35[:625] += fb1                                 # + fc1 bias (padded cols stay 0)

    # fc2: pad K 625 -> 640 (zero rows) and N 10 -> 128 (zero cols, lane-dense store).
    NP2 = 128
    Wp2 = np.zeros((NP1, NP2), np.float32)
    Wp2[:625, :10] = fw2.T

    # All biases in one lane-padded slab -> a single operand DMA.
    #   row 0: conv1 (288 used), row 1: conv2 (576 used), row 2: fused conv3*fc1 (640),
    #   row 3: fc2 (10 used, padded to the 128-lane output slab).
    b_all = np.zeros((4, NP1), np.float32)
    b_all[0, :HO * HO * C1] = np.tile(b1, HO * HO)
    b_all[1, :HO * HO * C2] = np.tile(b2, HO * HO)
    b_all[2, :NP1] = b35
    b_all[3, :10] = fb2

    bf16, f32 = jnp.bfloat16, jnp.float32
    return dict(
        k1=jnp.asarray(K1, bf16),      # [16, 288]
        k2=jnp.asarray(K2, bf16),      # [288, 576]
        k35=jnp.asarray(K35, bf16),    # [576, 640]  (conv3 . fc1 fused)
        k5=jnp.asarray(Wp2, bf16),     # [640, 128]
        b_all=jnp.asarray(b_all, f32),  # [4, 640]
    )


def _round_up(n, m):
    return ((n + m - 1) // m) * m


# ---------------------------------------------------------------------------
# TeacherModel forward (single fused pallas_call, batch-gridded)
# ---------------------------------------------------------------------------
def teacher_forward(packed, x_nchw, *, tb=256):
    B, C, H, W = x_nchw.shape
    assert (C, H, W) == (1, 4, 4), "packed weights assume [B, 1, 4, 4] inputs"
    # NCHW with C=1: flatten is exactly (y, x) order -> [B, 16] bf16 row per image.
    x2d = x_nchw.reshape(B, H * W).astype(jnp.bfloat16)

    # Batch tiling: TB rows per grid step (multiple of 8, capped at `tb`); pad B up.
    TB = min(tb, _round_up(max(B, 1), 8))
    B_pad = _round_up(B, TB)
    if B_pad != B:
        x2d = jnp.pad(x2d, ((0, B_pad - B), (0, 0)))

    out = pl.pallas_call(
        _teacher_fused_kernel,
        out_shape=jax.ShapeDtypeStruct((B_pad, 128), jnp.float32),
        grid=(B_pad // TB,),
        in_specs=[
            pl.BlockSpec((TB, 16), lambda i: (i, 0)),     # x rows (pipelined over batch)
            pl.BlockSpec((16, 288), lambda i: (0, 0)),    # conv1 unrolled   (resident)
            pl.BlockSpec((288, 576), lambda i: (0, 0)),   # conv2 unrolled   (resident)
            pl.BlockSpec((576, 640), lambda i: (0, 0)),   # conv3*fc1 fused  (resident)
            pl.BlockSpec((640, 128), lambda i: (0, 0)),   # fc2 lane-padded  (resident)
            pl.BlockSpec((4, 640), lambda i: (0, 0)),     # all biases, one DMA
        ],
        out_specs=pl.BlockSpec((TB, 128), lambda i: (i, 0)),
        compiler_params=pltpu.CompilerParams(
            dimension_semantics=("parallel",),            # megacore / v7x 2-TC sharding
            vmem_limit_bytes=32 * 1024 * 1024,            # ~1.3 MB weights + [TB,640] acts
        ),
    )(x2d, packed["k1"], packed["k2"], packed["k35"], packed["k5"], packed["b_all"])
    return out[:B, :10]


# ---------------------------------------------------------------------------
# Deterministic parameter init (PyTorch-style uniform(-1/sqrt(fan_in), +))
# ---------------------------------------------------------------------------
def init_params(key):
    ks = jax.random.split(key, 10)

    def u(k, shape, fan_in):
        bound = 1.0 / float(fan_in) ** 0.5
        return jax.random.uniform(k, shape, jnp.float32, -bound, bound)

    return dict(
        conv1_w=u(ks[0], (32, 1, 4, 4), 1 * 4 * 4),
        conv1_b=u(ks[1], (32,), 1 * 4 * 4),
        conv2_w=u(ks[2], (64, 32, 3, 3), 32 * 3 * 3),
        conv2_b=u(ks[3], (64,), 32 * 3 * 3),
        conv3_w=u(ks[4], (128, 64, 3, 3), 64 * 3 * 3),
        conv3_b=u(ks[5], (128,), 64 * 3 * 3),
        fc1_w=u(ks[6], (625, 128 * 3 * 3), 128 * 3 * 3),
        fc1_b=u(ks[7], (625,), 128 * 3 * 3),
        fc2_w=u(ks[8], (10, 625), 625),
        fc2_b=u(ks[9], (10,), 625),
    )


# ---------------------------------------------------------------------------
# Pure-JAX (f32) reference, matching the PyTorch module exactly
# ---------------------------------------------------------------------------
def teacher_forward_ref(params, x):
    def conv(x, w, b, pad):
        y = jax.lax.conv_general_dilated(
            x, w, window_strides=(1, 1), padding=[(pad, pad), (pad, pad)],
            dimension_numbers=("NCHW", "OIHW", "NCHW"))
        return y + b.reshape(1, -1, 1, 1)

    lrelu = lambda v: jnp.where(v > 0, v, 0.2 * v)
    x = lrelu(conv(x, params["conv1_w"], params["conv1_b"], 1))
    x = lrelu(conv(x, params["conv2_w"], params["conv2_b"], 1))
    x = conv(x, params["conv3_w"], params["conv3_b"], 1)
    x = x.reshape(x.shape[0], -1)                       # NCHW flatten: (c, y, x)
    x = lrelu(x @ params["fc1_w"].T + params["fc1_b"])
    return x @ params["fc2_w"].T + params["fc2_b"]


if __name__ == "__main__":
    key = jax.random.PRNGKey(0)
    k_x, k_p = jax.random.split(key)

    # 4x4 spatial input so conv3 output is 128*3*3 = 1152, matching fc1's input width.
    x = jax.random.normal(k_x, (2, 1, 4, 4), dtype=jnp.float32)
    params = init_params(k_p)
    packed = pack_params(params)        # one-time weight prep (off the hot path)

    fwd = jax.jit(teacher_forward)
    logits = jax.block_until_ready(fwd(packed, x))

    assert logits.shape == (2, 10), logits.shape
    assert bool(jnp.all(jnp.isfinite(logits)))

    # Sanity-check against the exact f32 reference (bf16 MXU operands => loose tol).
    ref = jax.block_until_ready(teacher_forward_ref(params, x))
    max_err = float(jnp.max(jnp.abs(logits - ref)))
    assert max_err < 5e-2, f"max abs error vs reference: {max_err}"

    print("KERNEL_OK")
</pallas_src>

<mosaic_0001>
module attributes {stable_mosaic.version = 11 : i64} {
  func.func @_teacher_fused_kernel(%arg0: i32, %arg1: memref<8x16xbf16, #tpu.memory_space<vmem>>, %arg2: memref<16x288xbf16, #tpu.memory_space<vmem>>, %arg3: memref<288x576xbf16, #tpu.memory_space<vmem>>, %arg4: memref<576x640xbf16, #tpu.memory_space<vmem>>, %arg5: memref<640x128xbf16, #tpu.memory_space<vmem>>, %arg6: memref<4x640xf32, #tpu.memory_space<vmem>>, %arg7: memref<8x128xf32, #tpu.memory_space<vmem>>) attributes {dimension_semantics = [#tpu.dimension_semantics<parallel>], iteration_bounds = array<i64: 1>, scalar_prefetch = 0 : i64, scratch_operands = 0 : i64, tpu.core_type = #tpu.core_type<tc>, window_params = [{transform_indices = @transform_0, window_bounds = array<i64: 8, 16>}, {pipeline_mode = #tpu.pipeline_mode<synchronous>, transform_indices = @transform_1, window_bounds = array<i64: 16, 288>}, {pipeline_mode = #tpu.pipeline_mode<synchronous>, transform_indices = @transform_2, window_bounds = array<i64: 288, 576>}, {pipeline_mode = #tpu.pipeline_mode<synchronous>, transform_indices = @transform_3, window_bounds = array<i64: 576, 640>}, {pipeline_mode = #tpu.pipeline_mode<synchronous>, transform_indices = @transform_4, window_bounds = array<i64: 640, 128>}, {pipeline_mode = #tpu.pipeline_mode<synchronous>, transform_indices = @transform_5, window_bounds = array<i64: 4, 640>}, {transform_indices = @transform_6, window_bounds = array<i64: 8, 128>}]} {
    %c0 = arith.constant 0 : index
    %c0_0 = arith.constant 0 : index
    %0 = vector.load %arg1[%c0, %c0_0] : memref<8x16xbf16, #tpu.memory_space<vmem>>, vector<8x16xbf16>
    %c0_1 = arith.constant 0 : index
    %c0_2 = arith.constant 0 : index
    %1 = vector.load %arg6[%c0_1, %c0_2] : memref<4x640xf32, #tpu.memory_space<vmem>>, vector<1x288xf32>
    %c0_3 = arith.constant 0 : index
    %c0_4 = arith.constant 0 : index
    %2 = vector.load %arg2[%c0_3, %c0_4] : memref<16x288xbf16, #tpu.memory_space<vmem>>, vector<16x288xbf16>
    %cst = arith.constant dense<0.000000e+00> : vector<8x288xf32>
    %3 = tpu.matmul %0, %2, %cst {dimension_numbers = #tpu.dot_dimension_numbers<[1], [0], [0], [1], [0, 0, 1, 1], [], []>} : vector<8x16xbf16>, vector<16x288xbf16>, vector<8x288xf32> -> vector<8x288xf32>
    %4 = vector.broadcast %1 : vector<1x288xf32> to vector<8x288xf32>
    %5 = arith.addf %3, %4 : vector<8x288xf32>
    %cst_5 = arith.constant 0.000000e+00 : f32
    %6 = vector.broadcast %cst_5 : f32 to vector<8x288xf32>
    %7 = arith.cmpf ogt, %5, %6 : vector<8x288xf32>
    %cst_6 = arith.constant 2.000000e-01 : f32
    %8 = vector.broadcast %cst_6 : f32 to vector<8x288xf32>
    %9 = arith.mulf %8, %5 : vector<8x288xf32>
    %10 = arith.select %7, %5, %9 : vector<8x288xi1>, vector<8x288xf32>
    %11 = arith.truncf %10 : vector<8x288xf32> to vector<8x288xbf16>
    %c1 = arith.constant 1 : index
    %c0_7 = arith.constant 0 : index
    %12 = vector.load %arg6[%c1, %c0_7] : memref<4x640xf32, #tpu.memory_space<vmem>>, vector<1x576xf32>
    %c0_8 = arith.constant 0 : index
    %c0_9 = arith.constant 0 : index
    %13 = vector.load %arg3[%c0_8, %c0_9] : memref<288x576xbf16, #tpu.memory_space<vmem>>, vector<288x576xbf16>
    %cst_10 = arith.constant dense<0.000000e+00> : vector<8x576xf32>
    %14 = tpu.matmul %11, %13, %cst_10 {dimension_numbers = #tpu.dot_dimension_numbers<[1], [0], [0], [1], [0, 0, 1, 1], [], []>} : vector<8x288xbf16>, vector<288x576xbf16>, vector<8x576xf32> -> vector<8x576xf32>
    %15 = vector.broadcast %12 : vector<1x576xf32> to vector<8x576xf32>
    %16 = arith.addf %14, %15 : vector<8x576xf32>
    %cst_11 = arith.constant 0.000000e+00 : f32
    %17 = vector.broadcast %cst_11 : f32 to vector<8x576xf32>
    %18 = arith.cmpf ogt, %16, %17 : vector<8x576xf32>
    %cst_12 = arith.constant 2.000000e-01 : f32
    %19 = vector.broadcast %cst_12 : f32 to vector<8x576xf32>
    %20 = arith.mulf %19, %16 : vector<8x576xf32>
    %21 = arith.select %18, %16, %20 : vector<8x576xi1>, vector<8x576xf32>
    %22 = arith.truncf %21 : vector<8x576xf32> to vector<8x576xbf16>
    %c2 = arith.constant 2 : index
    %c0_13 = arith.constant 0 : index
    %23 = vector.load %arg6[%c2, %c0_13] : memref<4x640xf32, #tpu.memory_space<vmem>>, vector<1x640xf32>
    %c0_14 = arith.constant 0 : index
    %c0_15 = arith.constant 0 : index
    %24 = vector.load %arg4[%c0_14, %c0_15] : memref<576x640xbf16, #tpu.memory_space<vmem>>, vector<576x640xbf16>
    %cst_16 = arith.constant dense<0.000000e+00> : vector<8x640xf32>
    %25 = tpu.matmul %22, %24, %cst_16 {dimension_numbers = #tpu.dot_dimension_numbers<[1], [0], [0], [1], [0, 0, 1, 1], [], []>} : vector<8x576xbf16>, vector<576x640xbf16>, vector<8x640xf32> -> vector<8x640xf32>
    %26 = vector.broadcast %23 : vector<1x640xf32> to vector<8x640xf32>
    %27 = arith.addf %25, %26 : vector<8x640xf32>
    %cst_17 = arith.constant 0.000000e+00 : f32
    %28 = vector.broadcast %cst_17 : f32 to vector<8x640xf32>
    %29 = arith.cmpf ogt, %27, %28 : vector<8x640xf32>
    %cst_18 = arith.constant 2.000000e-01 : f32
    %30 = vector.broadcast %cst_18 : f32 to vector<8x640xf32>
    %31 = arith.mulf %30, %27 : vector<8x640xf32>
    %32 = arith.select %29, %27, %31 : vector<8x640xi1>, vector<8x640xf32>
    %33 = arith.truncf %32 : vector<8x640xf32> to vector<8x640xbf16>
    %c3 = arith.constant 3 : index
    %c0_19 = arith.constant 0 : index
    %34 = vector.load %arg6[%c3, %c0_19] : memref<4x640xf32, #tpu.memory_space<vmem>>, vector<1x128xf32>
    %c0_20 = arith.constant 0 : index
    %c0_21 = arith.constant 0 : index
    %35 = vector.load %arg5[%c0_20, %c0_21] : memref<640x128xbf16, #tpu.memory_space<vmem>>, vector<640x128xbf16>
    %cst_22 = arith.constant dense<0.000000e+00> : vector<8x128xf32>
    %36 = tpu.matmul %33, %35, %cst_22 {dimension_numbers = #tpu.dot_dimension_numbers<[1], [0], [0], [1], [0, 0, 1, 1], [], []>} : vector<8x640xbf16>, vector<640x128xbf16>, vector<8x128xf32> -> vector<8x128xf32>
    %37 = vector.broadcast %34 : vector<1x128xf32> to vector<8x128xf32>
    %38 = arith.addf %36, %37 : vector<8x128xf32>
    %c0_23 = arith.constant 0 : index
    %c0_24 = arith.constant 0 : index
    %39 = vector.load %arg7[%c0_23, %c0_24] : memref<8x128xf32, #tpu.memory_space<vmem>>, vector<8x128xf32>
    tpu.vector_store %arg7[%c0_23, %c0_24], %38 {strides = array<i32>} : memref<8x128xf32, #tpu.memory_space<vmem>>, vector<8x128xf32>,
    return
  }
  func.func @transform_0(%arg0: i32) -> (i32, i32) {
    %c0_i32 = arith.constant 0 : i32
    %c0_i32_0 = arith.constant 0 : i32
    return %arg0, %c0_i32 : i32, i32
  }
  func.func @transform_1(%arg0: i32) -> (i32, i32) {
    %c0_i32 = arith.constant 0 : i32
    %c0_i32_0 = arith.constant 0 : i32
    %c0_i32_1 = arith.constant 0 : i32
    return %c0_i32, %c0_i32_0 : i32, i32
  }
  func.func @transform_2(%arg0: i32) -> (i32, i32) {
    %c0_i32 = arith.constant 0 : i32
    %c0_i32_0 = arith.constant 0 : i32
    %c0_i32_1 = arith.constant 0 : i32
    return %c0_i32, %c0_i32_0 : i32, i32
  }
  func.func @transform_3(%arg0: i32) -> (i32, i32) {
    %c0_i32 = arith.constant 0 : i32
    %c0_i32_0 = arith.constant 0 : i32
    %c0_i32_1 = arith.constant 0 : i32
    return %c0_i32, %c0_i32_0 : i32, i32
  }
  func.func @transform_4(%arg0: i32) -> (i32, i32) {
    %c0_i32 = arith.constant 0 : i32
    %c0_i32_0 = arith.constant 0 : i32
    %c0_i32_1 = arith.constant 0 : i32
    return %c0_i32, %c0_i32_0 : i32, i32
  }
  func.func @transform_5(%arg0: i32) -> (i32, i32) {
    %c0_i32 = arith.constant 0 : i32
    %c0_i32_0 = arith.constant 0 : i32
    %c0_i32_1 = arith.constant 0 : i32
    return %c0_i32, %c0_i32_0 : i32, i32
  }
  func.func @transform_6(%arg0: i32) -> (i32, i32) {
    %c0_i32 = arith.constant 0 : i32
    %c0_i32_0 = arith.constant 0 : i32
    return %arg0, %c0_i32 : i32, i32
  }
}

</mosaic_0001>

<llo_original>
// kernel: teacher_forward.1
$region0: #{teacher_forward.1}
  #allocation0 [shape = 'u32[]', space=smem, size = 0x4, offset = 0x4, fixed_abs, tag = 'smem constant byte address 0x4 - core index']
  #allocation1 [shape = 'u32[144,128]{1,0:T(1,128)}', space=vmem, size = 0x12000, scoped, tag = 'internal scratch']
  %s0 = inlined_call_operand.vmem [shape: bf16[8,16], index: 0, kind: input, shape index: {}]
  %s1 = inlined_call_operand.vmem [shape: bf16[16,288], index: 1, kind: input, shape index: {}]
  %s2 = inlined_call_operand.hbm [shape: bf16[288,576], index: 2, kind: input, shape index: {}]
  %s3 = inlined_call_operand.hbm [shape: bf16[576,640], index: 3, kind: input, shape index: {}]
  %s4 = inlined_call_operand.hbm [shape: bf16[640,128], index: 4, kind: input, shape index: {}]
  %s5 = inlined_call_operand.hbm [shape: f32[4,640], index: 5, kind: input, shape index: {}]
  %s6 = inlined_call_operand.vmem [shape: f32[8,128], index: 6, kind: output, shape index: {}]
  %s7 = sld [smem:[#allocation0]]
  $region50: #{teacher_forward.1} parent=0
    _
  %s9 = ssub.s32 1, %s7
  %s10 = scalar_select 0, %s9, %s7
  $region1: #{teacher_forward.1} parent=0
    #allocation2 [shape = 'u8[368640]{0}', space=vmem, size = 0x5a000, scoped, tag = 'input window, operand 2, single buffered']
    #allocation3 [shape = 's32[1]{0}', space=sflag, size = 0x4, scoped, tag = 'scoped memory for teacher_forward.1']
    #allocation4 [shape = 'u8[737280]{0}', space=vmem, size = 0xb4000, scoped, tag = 'input window, operand 3, single buffered']
    #allocation5 [shape = 's32[1]{0}', space=sflag, size = 0x4, scoped, tag = 'scoped memory for teacher_forward.1']
    #allocation6 [shape = 'u8[163840]{0}', space=vmem, size = 0x28000, scoped, tag = 'input window, operand 4, single buffered']
    #allocation7 [shape = 'u8[10240]{0}', space=vmem, size = 0x2800, scoped, tag = 'input window, operand 5, single buffered']
    #allocation8 [shape = 's32[1]{0}', space=sflag, size = 0x4, scoped, tag = 'scoped memory for teacher_forward.1']
    %11 = vsyncpa [#allocation3], 0
    %12 = vsyncpa [#allocation5], 0
    %13 = vsyncpa [#allocation8], 0
    // Predicated region
    $region2: #{teacher_forward.1} parent=1 // pred_check
      _
    $region3: #{teacher_forward.1} parent=1 // pred_check_branch
      %15 = sbr.rel (0) target = $region5
    $region4: #{teacher_forward.1} parent=1 // pred_region
      _
    $region5: #{teacher_forward.1} parent=1 // pred_fallthru
      _
    // Predicated region
    $region6: #{teacher_forward.1} parent=1 // pred_check
      _
    $region7: #{teacher_forward.1} parent=1 // pred_check_branch
      %17 = sbr.rel (0) target = $region9
    $region8: #{teacher_forward.1} parent=1 // pred_region
      _
    $region9: #{teacher_forward.1} parent=1 // pred_fallthru
      _
    // Predicated region
    $region10: #{teacher_forward.1} parent=1 // pred_check
      _
    $region11: #{teacher_forward.1} parent=1 // pred_check_branch
      %19 = sbr.rel (0) target = $region13
    $region12: #{teacher_forward.1} parent=1 // pred_region
      %s21 = ssub.s32 11520, 11520
      %22 = vsyncadd [#allocation3], %s21
      %s23 = sshll.u32 [#allocation2], 4
      %s24 = int_to_ptr.vmem [resolvable:$true] %s23
      %29 = dma.hbm_to_vmem [thread:$0]  %s2, 11520, %s24, [#allocation3], 320, 320, 20
    $region13: #{teacher_forward.1} parent=1 // pred_fallthru
      _
    // Predicated region
    $region14: #{teacher_forward.1} parent=1 // pred_check
      _
    $region15: #{teacher_forward.1} parent=1 // pred_check_branch
      %31 = sbr.rel (0) target = $region17
    $region16: #{teacher_forward.1} parent=1 // pred_region
      %s33 = ssub.s32 23040, 23040
      %34 = vsyncadd [#allocation5], %s33
      %s35 = sshll.u32 [#allocation4], 4
      %s36 = int_to_ptr.vmem [resolvable:$true] %s35
      %41 = dma.hbm_to_vmem [thread:$0]  %s3, 23040, %s36, [#allocation5], 320, 320, 20
    $region17: #{teacher_forward.1} parent=1 // pred_fallthru
      _
    // Predicated region
    $region18: #{teacher_forward.1} parent=1 // pred_check
      _
    $region19: #{teacher_forward.1} parent=1 // pred_check_branch
      %43 = sbr.rel (0) target = $region21
    $region20: #{teacher_forward.1} parent=1 // pred_region
      %s45 = ssub.s32 5120, 5120
      %46 = vsyncadd [#allocation5], %s45
      %s47 = sshll.u32 [#allocation6], 4
      %s48 = int_to_ptr.vmem [resolvable:$true] %s47
      %53 = dma.hbm_to_vmem [thread:$0]  %s4, 5120, %s48, [#allocation5], 64, 64, 4
    $region21: #{teacher_forward.1} parent=1 // pred_fallthru
      _
    // Predicated region
    $region22: #{teacher_forward.1} parent=1 // pred_check
      _
    $region23: #{teacher_forward.1} parent=1 // pred_check_branch
      %55 = sbr.rel (0) target = $region25
    $region24: #{teacher_forward.1} parent=1 // pred_region
      %s57 = ssub.s32 320, 320
      %58 = vsyncadd [#allocation8], %s57
      %s60 = sshll.u32 [#allocation7], 4
      %s61 = int_to_ptr.vmem [resolvable:$true] %s60
      %63 = dma.hbm_to_vmem [thread:$0]  %s5, 320, %s61, [#allocation8]
    $region25: #{teacher_forward.1} parent=1 // pred_fallthru
      _
    // Predicated region
    $region26: #{teacher_forward.1} parent=1 // pred_check
      _
    $region27: #{teacher_forward.1} parent=1 // pred_check_branch
      %65 = sbr.rel (0) target = $region29
    $region28: #{teacher_forward.1} parent=1 // pred_region
      %66 = dma.done [#allocation3], 11520
    $region29: #{teacher_forward.1} parent=1 // pred_fallthru
      _
    // Predicated region
    $region30: #{teacher_forward.1} parent=1 // pred_check
      _
    $region31: #{teacher_forward.1} parent=1 // pred_check_branch
      %68 = sbr.rel (0) target = $region33
    $region32: #{teacher_forward.1} parent=1 // pred_region
      %69 = dma.done [#allocation5], 23040
    $region33: #{teacher_forward.1} parent=1 // pred_fallthru
      _
    // Predicated region
    $region34: #{teacher_forward.1} parent=1 // pred_check
      _
    $region35: #{teacher_forward.1} parent=1 // pred_check_branch
      %71 = sbr.rel (0) target = $region37
    $region36: #{teacher_forward.1} parent=1 // pred_region
      %72 = dma.done [#allocation5], 5120
    $region37: #{teacher_forward.1} parent=1 // pred_fallthru
      _
    // Predicated region
    $region38: #{teacher_forward.1} parent=1 // pred_check
      _
    $region39: #{teacher_forward.1} parent=1 // pred_check_branch
      %74 = sbr.rel (0) target = $region41
    $region40: #{teacher_forward.1} parent=1 // pred_region
      %75 = dma.done [#allocation8], 320
    $region41: #{teacher_forward.1} parent=1 // pred_fallthru
      _
    %v77 = vld [vmem:[%s0] sm:$0xf]
    %v78 = vld [vmem:[#allocation7] ss:$4 sm:$0x7]
    %v79 = vld [vmem:[%s1] sm:$0xff]
    %v80 = vld [vmem:[%s1 + $0x8] sm:$0xf]
    %v81 = vld [vmem:[%s1 + $0xc] sm:$0xff]
    %v82 = vld [vmem:[%s1 + $0x14] sm:$0xf]
    %v84 = vlaneseq
    %v85 = vshrl.u32 %v84, 7
    %v86 = vsub.s32 0, %v85
    %v87 = vrot.slane %v78, %v86
    %v88 = vlaneseq
    %v89 = vshrl.u32 %v88, 7
    %v90 = vsub.s32 1, %v89
    %v91 = vrot.slane %v78, %v90
    %v92 = vlaneseq
    %v93 = vshrl.u32 %v92, 7
    %v94 = vsub.s32 2, %v93
    %v95 = vrot.slane %v78, %v94
    %v103 = vunpack.c.l.b16 %v79
    %v104 = vunpack.c.h.b16 %v79
    %v105 = vunpack.c.l.b16 %v80
    %v106 = vunpack.c.l.b16 %v81
    %v107 = vunpack.c.h.b16 %v81
    %v108 = vunpack.c.l.b16 %v82
    %v109 = vpack.c.b16 %v106, %v103
    %v110 = vpack.c.b16 %v107, %v104
    %v111 = vpack.c.b16 %v108, %v105
    %vm115 = vcmask 130048
    %v117 = vsel %vm115, %v77, 0
    %119 = vmatprep.subr.bf16.mxu0 %v110
    %120 = vmatpush1.bf16.msra.mxu0 %v109
    %121 = vmatprep.subr.bf16.mxu0 0
    %122 = vmatpush1.bf16.msra.mxu0 0
    %123 = vmatprep.subr.bf16.mxu0 0
    %124 = vmatpush1.bf16.msra.mxu0 0
    %125 = vmatprep.subr.bf16.mxu0 0
    %126 = vmatpush1.bf16.msra.mxu0 0
    %127 = vmatprep.subr.bf16.mxu0 0
    %128 = vmatpush1.bf16.msra.mxu0 0
    %129 = vmatprep.subr.bf16.mxu0 0
    %130 = vmatpush1.bf16.msra.mxu0 0
    %131 = vmatprep.subr.bf16.mxu0 0
    %132 = vmatpush1.bf16.msra.mxu0 0
    %133 = vmatprep.subr.bf16.mxu0 0
    %134 = vmatpush1.bf16.msra.mxu0 0
    %135 = vmatprep.subr.bf16.mxu0 0
    %136 = vmatpush1.bf16.msra.mxu0 0
    %137 = vmatprep.subr.bf16.mxu0 0
    %138 = vmatpush1.bf16.msra.mxu0 0
    %139 = vmatprep.subr.bf16.mxu0 0
    %140 = vmatpush1.bf16.msra.mxu0 0
    %141 = vmatprep.subr.bf16.mxu0 0
    %142 = vmatpush1.bf16.msra.mxu0 0
    %143 = vmatprep.subr.bf16.mxu0 0
    %144 = vmatpush1.bf16.msra.mxu0 0
    %145 = vmatprep.subr.bf16.mxu0 0
    %146 = vmatpush1.bf16.msra.mxu0 0
    %147 = vmatprep.subr.bf16.mxu0 0
    %148 = vmatpush1.bf16.msra.mxu0 0
    %149 = vmatprep.subr.bf16.mxu0 0
    %150 = vmatpush1.bf16.msra.mxu0 0
    %151 = vmatprep.mubr.bf16.mxu0 0
    %152 = vmatmul.mubr.bf16.gmra.mrb[0].mxu0 %v117
    %v153 = vpop.f32.mrb[0].mxu0
    %v154 = vadd.f32 %v87, %v153
    %v155 = vpop.f32.mrb[0].mxu0
    %v156 = vadd.f32 %v91, %v155
    %v157 = vpop.f32.mrb[0].mxu0
    %v158 = vpop.f32.mrb[0].mxu0
    %159 = vdwg.mxu0
    %160 = vmatprep.subr.bf16.mxu0 0
    %161 = vmatpush1.bf16.msra.mxu0 %v111
    %162 = vmatprep.subr.bf16.mxu0 0
    %163 = vmatpush1.bf16.msra.mxu0 0
    %164 = vmatprep.subr.bf16.mxu0 0
    %165 = vmatpush1.bf16.msra.mxu0 0
    %166 = vmatprep.subr.bf16.mxu0 0
    %167 = vmatpush1.bf16.msra.mxu0 0
    %168 = vmatprep.subr.bf16.mxu0 0
    %169 = vmatpush1.bf16.msra.mxu0 0
    %170 = vmatprep.subr.bf16.mxu0 0
    %171 = vmatpush1.bf16.msra.mxu0 0
    %172 = vmatprep.subr.bf16.mxu0 0
    %173 = vmatpush1.bf16.msra.mxu0 0
    %174 = vmatprep.subr.bf16.mxu0 0
    %175 = vmatpush1.bf16.msra.mxu0 0
    %176 = vmatprep.subr.bf16.mxu0 0
    %177 = vmatpush1.bf16.msra.mxu0 0
    %178 = vmatprep.subr.bf16.mxu0 0
    %179 = vmatpush1.bf16.msra.mxu0 0
    %180 = vmatprep.subr.bf16.mxu0 0
    %181 = vmatpush1.bf16.msra.mxu0 0
    %182 = vmatprep.subr.bf16.mxu0 0
    %183 = vmatpush1.bf16.msra.mxu0 0
    %184 = vmatprep.subr.bf16.mxu0 0
    %185 = vmatpush1.bf16.msra.mxu0 0
    %186 = vmatprep.subr.bf16.mxu0 0
    %187 = vmatpush1.bf16.msra.mxu0 0
    %188 = vmatprep.subr.bf16.mxu0 0
    %189 = vmatpush1.bf16.msra.mxu0 0
    %190 = vmatprep.subr.bf16.mxu0 0
    %191 = vmatpush1.bf16.msra.mxu0 0
    %192 = vmatprep.mubr.bf16.mxu0 0
    %193 = vmatmul.mubr.bf16.gmra.mrb[0].mxu0 %v117
    %v194 = vpop.f32.mrb[0].mxu0
    %v195 = vadd.f32 %v95, %v194
    %v196 = vpop.f32.mrb[0].mxu0
    %v197 = vpop.f32.mrb[0].mxu0
    %v198 = vpop.f32.mrb[0].mxu0
    %199 = vdwg.mxu0
    %vm200 = vcmp.gt.f32.partialorder %v154, 0.0
    %vm201 = vcmp.gt.f32.partialorder %v156, 0.0
    %vm202 = vcmp.gt.f32.partialorder %v195, 0.0
    %v203 = vmul.f32 %v154, 0.2
    %v204 = vmul.f32 %v156, 0.2
    %v205 = vmul.f32 %v195, 0.2
    %v206 = vsel %vm200, %v154, %v203
    %v207 = vsel %vm201, %v156, %v204
    %v208 = vsel %vm202, %v195, %v205
    %v209 = vpack.c.bf16 %v206, %v206
    %v210 = vpack.c.bf16 %v207, %v207
    %v211 = vpack.c.bf16 %v208, %v208
    %s212 = scalar_lea.vmem [#allocation7], 1
    %v213 = vld [vmem:[%s212] ss:$4 sm:$0x1f]
    %v214 = vld [vmem:[#allocation2] sm:$0xff]
    %v215 = vld [vmem:[#allocation2 + $0x8] sm:$0xff]
    %v216 = vld [vmem:[#allocation2 + $0x10] sm:$0xf]
    %v217 = vld [vmem:[#allocation2 + $0x14] sm:$0xff]
    %v218 = vld [vmem:[#allocation2 + $0x1c] sm:$0xff]
    %v219 = vld [vmem:[#allocation2 + $0x24] sm:$0xf]
    %v220 = vld [vmem:[#allocation2 + $0x28] sm:$0xff]
    %v221 = vld [vmem:[#allocation2 + $0x30] sm:$0xff]
    %v222 = vld [vmem:[#allocation2 + $0x38] sm:$0xf]
    %v223 = vld [vmem:[#allocation2 + $0x3c] sm:$0xff]
    %v224 = vld [vmem:[#allocation2 + $0x44] sm:$0xff]
    %v225 = vld [vmem:[#allocation2 + $0x4c] sm:$0xf]
    %v226 = vld [vmem:[#allocation2 + $0x50] sm:$0xff]
    %v227 = vld [vmem:[#allocation2 + $0x58] sm:$0xff]
    %v228 = vld [vmem:[#allocation2 + $0x60] sm:$0xf]
    %v229 = vld [vmem:[#allocation2 + $0x64] sm:$0xff]
    %v230 = vld [vmem:[#allocation2 + $0x6c] sm:$0xff]
    %v231 = vld [vmem:[#allocation2 + $0x74] sm:$0xf]
    %v232 = vld [vmem:[#allocation2 + $0x78] sm:$0xff]
    %v233 = vld [vmem:[#allocation2 + $0x80] sm:$0xff]
    %v234 = vld [vmem:[#allocation2 + $0x88] sm:$0xf]
    %v235 = vld [vmem:[#allocation2 + $0x8c] sm:$0xff]
    %v236 = vld [vmem:[#allocation2 + $0x94] sm:$0xff]
    %v237 = vld [vmem:[#allocation2 + $0x9c] sm:$0xf]
    %v238 = vld [vmem:[#allocation2 + $0xa0] sm:$0xff]
    %v239 = vld [vmem:[#allocation2 + $0xa8] sm:$0xff]
    %v240 = vld [vmem:[#allocation2 + $0xb0] sm:$0xf]
    %v241 = vld [vmem:[#allocation2 + $0xb4] sm:$0xff]
    %v242 = vld [vmem:[#allocation2 + $0xbc] sm:$0xff]
    %v243 = vld [vmem:[#allocation2 + $0xc4] sm:$0xf]
    %v244 = vld [vmem:[#allocation2 + $0xc8] sm:$0xff]
    %v245 = vld [vmem:[#allocation2 + $0xd0] sm:$0xff]
    %v246 = vld [vmem:[#allocation2 + $0xd8] sm:$0xf]
    %v247 = vld [vmem:[#allocation2 + $0xdc] sm:$0xff]
    %v248 = vld [vmem:[#allocation2 + $0xe4] sm:$0xff]
    %v249 = vld [vmem:[#allocation2 + $0xec] sm:$0xf]
    %v250 = vld [vmem:[#allocation2 + $0xf0] sm:$0xff]
    %v251 = vld [vmem:[#allocation2 + $0xf8] sm:$0xff]
    %v252 = vld [vmem:[#allocation2 + $0x100] sm:$0xf]
    %v253 = vld [vmem:[#allocation2 + $0x104] sm:$0xff]
    %v254 = vld [vmem:[#allocation2 + $0x10c] sm:$0xff]
    %v255 = vld [vmem:[#allocation2 + $0x114] sm:$0xf]
    %v256 = vld [vmem:[#allocation2 + $0x118] sm:$0xff]
    %v257 = vld [vmem:[#allocation2 + $0x120] sm:$0xff]
    %v258 = vld [vmem:[#allocation2 + $0x128] sm:$0xf]
    %v259 = vld [vmem:[#allocation2 + $0x12c] sm:$0xff]
    %v260 = vld [vmem:[#allocation2 + $0x134] sm:$0xff]
    %v261 = vld [vmem:[#allocation2 + $0x13c] sm:$0xf]
    %v262 = vld [vmem:[#allocation2 + $0x140] sm:$0xff]
    %v263 = vld [vmem:[#allocation2 + $0x148] sm:$0xff]
    %v264 = vld [vmem:[#allocation2 + $0x150] sm:$0xf]
    %v265 = vld [vmem:[#allocation2 + $0x154] sm:$0xff]
    %v266 = vld [vmem:[#allocation2 + $0x15c] sm:$0xff]
    %v267 = vld [vmem:[#allocation2 + $0x164] sm:$0xf]
    %v268 = vld [vmem:[#allocation2 + $0x168] sm:$0xff]
    %v269 = vld [vmem:[#allocation2 + $0x170] sm:$0xff]
    %v270 = vld [vmem:[#allocation2 + $0x178] sm:$0xf]
    %v271 = vld [vmem:[#allocation2 + $0x17c] sm:$0xff]
    %v272 = vld [vmem:[#allocation2 + $0x184] sm:$0xff]
    %v273 = vld [vmem:[#allocation2 + $0x18c] sm:$0xf]
    %v274 = vld [vmem:[#allocation2 + $0x190] sm:$0xff]
    %v275 = vld [vmem:[#allocation2 + $0x198] sm:$0xff]
    %v276 = vld [vmem:[#allocation2 + $0x1a0] sm:$0xf]
    %v277 = vld [vmem:[#allocation2 + $0x1a4] sm:$0xff]
    %v278 = vld [vmem:[#allocation2 + $0x1ac] sm:$0xff]
    %v279 = vld [vmem:[#allocation2 + $0x1b4] sm:$0xf]
    %v280 = vld [vmem:[#allocation2 + $0x1b8] sm:$0xff]
    %v281 = vld [vmem:[#allocation2 + $0x1c0] sm:$0xff]
    %v282 = vld [vmem:[#allocation2 + $0x1c8] sm:$0xf]
    %v283 = vld [vmem:[#allocation2 + $0x1cc] sm:$0xff]
    %v284 = vld [vmem:[#allocation2 + $0x1d4] sm:$0xff]
    %v285 = vld [vmem:[#allocation2 + $0x1dc] sm:$0xf]
    %v286 = vld [vmem:[#allocation2 + $0x1e0] sm:$0xff]
    %v287 = vld [vmem:[#allocation2 + $0x1e8] sm:$0xff]
    %v288 = vld [vmem:[#allocation2 + $0x1f0] sm:$0xf]
    %v289 = vld [vmem:[#allocation2 + $0x1f4] sm:$0xff]
    %v290 = vld [vmem:[#allocation2 + $0x1fc] sm:$0xff]
    %v291 = vld [vmem:[#allocation2 + $0x204] sm:$0xf]
    %v292 = vld [vmem:[#allocation2 + $0x208] sm:$0xff]
    %v293 = vld [vmem:[#allocation2 + $0x210] sm:$0xff]
    %v294 = vld [vmem:[#allocation2 + $0x218] sm:$0xf]
    %v295 = vld [vmem:[#allocation2 + $0x21c] sm:$0xff]
    %v296 = vld [vmem:[#allocation2 + $0x224] sm:$0xff]
    %v297 = vld [vmem:[#allocation2 + $0x22c] sm:$0xf]
    %v298 = vld [vmem:[#allocation2 + $0x230] sm:$0xff]
    %v299 = vld [vmem:[#allocation2 + $0x238] sm:$0xff]
    %v300 = vld [vmem:[#allocation2 + $0x240] sm:$0xf]
    %v301 = vld [vmem:[#allocation2 + $0x244] sm:$0xff]
    %v302 = vld [vmem:[#allocation2 + $0x24c] sm:$0xff]
    %v303 = vld [vmem:[#allocation2 + $0x254] sm:$0xf]
    %v304 = vld [vmem:[#allocation2 + $0x258] sm:$0xff]
    %v305 = vld [vmem:[#allocation2 + $0x260] sm:$0xff]
    %v306 = vld [vmem:[#allocation2 + $0x268] sm:$0xf]
    %v307 = vld [vmem:[#allocation2 + $0x26c] sm:$0xff]
    %v308 = vld [vmem:[#allocation2 + $0x274] sm:$0xff]
    %v309 = vld [vmem:[#allocation2 + $0x27c] sm:$0xf]
    %v310 = vld [vmem:[#allocation2 + $0x280] sm:$0xff]
    %v311 = vld [vmem:[#allocation2 + $0x288] sm:$0xff]
    %v312 = vld [vmem:[#allocation2 + $0x290] sm:$0xf]
    %v313 = vld [vmem:[#allocation2 + $0x294] sm:$0xff]
    %v314 = vld [vmem:[#allocation2 + $0x29c] sm:$0xff]
    %v315 = vld [vmem:[#allocation2 + $0x2a4] sm:$0xf]
    %v316 = vld [vmem:[#allocation2 + $0x2a8] sm:$0xff]
    %v317 = vld [vmem:[#allocation2 + $0x2b0] sm:$0xff]
    %v318 = vld [vmem:[#allocation2 + $0x2b8] sm:$0xf]
    %v319 = vld [vmem:[#allocation2 + $0x2bc] sm:$0xff]
    %v320 = vld [vmem:[#allocation2 + $0x2c4] sm:$0xff]
    %v321 = vld [vmem:[#allocation2 + $0x2cc] sm:$0xf]
    %v323 = vlaneseq
    %v324 = vshrl.u32 %v323, 7
    %v325 = vsub.s32 0, %v324
    %v326 = vrot.slane %v213, %v325
    %v327 = vlaneseq
    %v328 = vshrl.u32 %v327, 7
    %v329 = vsub.s32 1, %v328
    %v330 = vrot.slane %v213, %v329
    %v331 = vlaneseq
    %v332 = vshrl.u32 %v331, 7
    %v333 = vsub.s32 2, %v332
    %v334 = vrot.slane %v213, %v333
    %v335 = vlaneseq
    %v336 = vshrl.u32 %v335, 7
    %v337 = vsub.s32 3, %v336
    %v338 = vrot.slane %v213, %v337
    %v339 = vlaneseq
    %v340 = vshrl.u32 %v339, 7
    %v341 = vsub.s32 4, %v340
    %v342 = vrot.slane %v213, %v341
    %v456 = vunpack.c.l.b16 %v214
    %v457 = vunpack.c.h.b16 %v214
    %v458 = vunpack.c.l.b16 %v215
    %v459 = vunpack.c.h.b16 %v215
    %v460 = vunpack.c.l.b16 %v216
    %v461 = vunpack.c.l.b16 %v217
    %v462 = vunpack.c.h.b16 %v217
    %v463 = vunpack.c.l.b16 %v218
    %v464 = vunpack.c.h.b16 %v218
    %v465 = vunpack.c.l.b16 %v219
    %v466 = vunpack.c.l.b16 %v220
    %v467 = vunpack.c.h.b16 %v220
    %v468 = vunpack.c.l.b16 %v221
    %v469 = vunpack.c.h.b16 %v221
    %v470 = vunpack.c.l.b16 %v222
    %v471 = vunpack.c.l.b16 %v223
    %v472 = vunpack.c.h.b16 %v223
    %v473 = vunpack.c.l.b16 %v224
    %v474 = vunpack.c.h.b16 %v224
    %v475 = vunpack.c.l.b16 %v225
    %v476 = vunpack.c.l.b16 %v226
    %v477 = vunpack.c.h.b16 %v226
    %v478 = vunpack.c.l.b16 %v227
    %v479 = vunpack.c.h.b16 %v227
    %v480 = vunpack.c.l.b16 %v228
    %v481 = vunpack.c.l.b16 %v229
    %v482 = vunpack.c.h.b16 %v229
    %v483 = vunpack.c.l.b16 %v230
    %v484 = vunpack.c.h.b16 %v230
    %v485 = vunpack.c.l.b16 %v231
    %v486 = vunpack.c.l.b16 %v232
    %v487 = vunpack.c.h.b16 %v232
    %v488 = vunpack.c.l.b16 %v233
    %v489 = vunpack.c.h.b16 %v233
    %v490 = vunpack.c.l.b16 %v234
    %v491 = vunpack.c.l.b16 %v235
    %v492 = vunpack.c.h.b16 %v235
    %v493 = vunpack.c.l.b16 %v236
    %v494 = vunpack.c.h.b16 %v236
    %v495 = vunpack.c.l.b16 %v237
    %v496 = vunpack.c.l.b16 %v238
    %v497 = vunpack.c.h.b16 %v238
    %v498 = vunpack.c.l.b16 %v239
    %v499 = vunpack.c.h.b16 %v239
    %v500 = vunpack.c.l.b16 %v240
    %v501 = vunpack.c.l.b16 %v241
    %v502 = vunpack.c.h.b16 %v241
    %v503 = vunpack.c.l.b16 %v242
    %v504 = vunpack.c.h.b16 %v242
    %v505 = vunpack.c.l.b16 %v243
    %v506 = vunpack.c.l.b16 %v244
    %v507 = vunpack.c.h.b16 %v244
    %v508 = vunpack.c.l.b16 %v245
    %v509 = vunpack.c.h.b16 %v245
    %v510 = vunpack.c.l.b16 %v246
    %v511 = vunpack.c.l.b16 %v247
    %v512 = vunpack.c.h.b16 %v247
    %v513 = vunpack.c.l.b16 %v248
    %v514 = vunpack.c.h.b16 %v248
    %v515 = vunpack.c.l.b16 %v249
    %v516 = vunpack.c.l.b16 %v250
    %v517 = vunpack.c.h.b16 %v250
    %v518 = vunpack.c.l.b16 %v251
    %v519 = vunpack.c.h.b16 %v251
    %v520 = vunpack.c.l.b16 %v252
    %v521 = vunpack.c.l.b16 %v253
    %v522 = vunpack.c.h.b16 %v253
    %v523 = vunpack.c.l.b16 %v254
    %v524 = vunpack.c.h.b16 %v254
    %v525 = vunpack.c.l.b16 %v255
    %v526 = vunpack.c.l.b16 %v256
    %v527 = vunpack.c.h.b16 %v256
    %v528 = vunpack.c.l.b16 %v257
    %v529 = vunpack.c.h.b16 %v257
    %v530 = vunpack.c.l.b16 %v258
    %v531 = vunpack.c.l.b16 %v259
    %v532 = vunpack.c.h.b16 %v259
    %v533 = vunpack.c.l.b16 %v260
    %v534 = vunpack.c.h.b16 %v260
    %v535 = vunpack.c.l.b16 %v261
    %v536 = vunpack.c.l.b16 %v262
    %v537 = vunpack.c.h.b16 %v262
    %v538 = vunpack.c.l.b16 %v263
    %v539 = vunpack.c.h.b16 %v263
    %v540 = vunpack.c.l.b16 %v264
    %v541 = vunpack.c.l.b16 %v265
    %v542 = vunpack.c.h.b16 %v265
    %v543 = vunpack.c.l.b16 %v266
    %v544 = vunpack.c.h.b16 %v266
    %v545 = vunpack.c.l.b16 %v267
    %v546 = vunpack.c.l.b16 %v268
    %v547 = vunpack.c.h.b16 %v268
    %v548 = vunpack.c.l.b16 %v269
    %v549 = vunpack.c.h.b16 %v269
    %v550 = vunpack.c.l.b16 %v270
    %v551 = vunpack.c.l.b16 %v271
    %v552 = vunpack.c.h.b16 %v271
    %v553 = vunpack.c.l.b16 %v272
    %v554 = vunpack.c.h.b16 %v272
    %v555 = vunpack.c.l.b16 %v273
    %v556 = vunpack.c.l.b16 %v274
    %v557 = vunpack.c.h.b16 %v274
    %v558 = vunpack.c.l.b16 %v275
    %v559 = vunpack.c.h.b16 %v275
    %v560 = vunpack.c.l.b16 %v276
    %v561 = vunpack.c.l.b16 %v277
    %v562 = vunpack.c.h.b16 %v277
    %v563 = vunpack.c.l.b16 %v278
    %v564 = vunpack.c.h.b16 %v278
    %v565 = vunpack.c.l.b16 %v279
    %v566 = vunpack.c.l.b16 %v280
    %v567 = vunpack.c.h.b16 %v280
    %v568 = vunpack.c.l.b16 %v281
    %v569 = vunpack.c.h.b16 %v281
    %v570 = vunpack.c.l.b16 %v282
    %v571 = vunpack.c.l.b16 %v283
    %v572 = vunpack.c.h.b16 %v283
    %v573 = vunpack.c.l.b16 %v284
    %v574 = vunpack.c.h.b16 %v284
    %v575 = vunpack.c.l.b16 %v285
    %v576 = vunpack.c.l.b16 %v286
    %v577 = vunpack.c.h.b16 %v286
    %v578 = vunpack.c.l.b16 %v287
    %v579 = vunpack.c.h.b16 %v287
    %v580 = vunpack.c.l.b16 %v288
    %v581 = vunpack.c.l.b16 %v289
    %v582 = vunpack.c.h.b16 %v289
    %v583 = vunpack.c.l.b16 %v290
    %v584 = vunpack.c.h.b16 %v290
    %v585 = vunpack.c.l.b16 %v291
    %v586 = vunpack.c.l.b16 %v292
    %v587 = vunpack.c.h.b16 %v292
    %v588 = vunpack.c.l.b16 %v293
    %v589 = vunpack.c.h.b16 %v293
    %v590 = vunpack.c.l.b16 %v294
    %v591 = vunpack.c.l.b16 %v295
    %v592 = vunpack.c.h.b16 %v295
    %v593 = vunpack.c.l.b16 %v296
    %v594 = vunpack.c.h.b16 %v296
    %v595 = vunpack.c.l.b16 %v297
    %v596 = vunpack.c.l.b16 %v298
    %v597 = vunpack.c.h.b16 %v298
    %v598 = vunpack.c.l.b16 %v299
    %v599 = vunpack.c.h.b16 %v299
    %v600 = vunpack.c.l.b16 %v300
    %v601 = vunpack.c.l.b16 %v301
    %v602 = vunpack.c.h.b16 %v301
    %v603 = vunpack.c.l.b16 %v302
    %v604 = vunpack.c.h.b16 %v302
    %v605 = vunpack.c.l.b16 %v303
    %v606 = vunpack.c.l.b16 %v304
    %v607 = vunpack.c.h.b16 %v304
    %v608 = vunpack.c.l.b16 %v305
    %v609 = vunpack.c.h.b16 %v305
    %v610 = vunpack.c.l.b16 %v306
    %v611 = vunpack.c.l.b16 %v307
    %v612 = vunpack.c.h.b16 %v307
    %v613 = vunpack.c.l.b16 %v308
    %v614 = vunpack.c.h.b16 %v308
    %v615 = vunpack.c.l.b16 %v309
    %v616 = vunpack.c.l.b16 %v310
    %v617 = vunpack.c.h.b16 %v310
    %v618 = vunpack.c.l.b16 %v311
    %v619 = vunpack.c.h.b16 %v311
    %v620 = vunpack.c.l.b16 %v312
    %v621 = vunpack.c.l.b16 %v313
    %v622 = vunpack.c.h.b16 %v313
    %v623 = vunpack.c.l.b16 %v314
    %v624 = vunpack.c.h.b16 %v314
    %v625 = vunpack.c.l.b16 %v315
    %v626 = vunpack.c.l.b16 %v316
    %v627 = vunpack.c.h.b16 %v316
    %v628 = vunpack.c.l.b16 %v317
    %v629 = vunpack.c.h.b16 %v317
    %v630 = vunpack.c.l.b16 %v318
    %v631 = vunpack.c.l.b16 %v319
    %v632 = vunpack.c.h.b16 %v319
    %v633 = vunpack.c.l.b16 %v320
    %v634 = vunpack.c.h.b16 %v320
    %v635 = vunpack.c.l.b16 %v321
    %v636 = vpack.c.b16 %v461, %v456
    %v637 = vpack.c.b16 %v462, %v457
    %v638 = vpack.c.b16 %v463, %v458
    %v639 = vpack.c.b16 %v464, %v459
    %v640 = vpack.c.b16 %v465, %v460
    %v641 = vpack.c.b16 %v471, %v466
    %v642 = vpack.c.b16 %v472, %v467
    %v643 = vpack.c.b16 %v473, %v468
    %v644 = vpack.c.b16 %v474, %v469
    %v645 = vpack.c.b16 %v475, %v470
    %v646 = vpack.c.b16 %v481, %v476
    %v647 = vpack.c.b16 %v482, %v477
    %v648 = vpack.c.b16 %v483, %v478
    %v649 = vpack.c.b16 %v484, %v479
    %v650 = vpack.c.b16 %v485, %v480
    %v651 = vpack.c.b16 %v491, %v486
    %v652 = vpack.c.b16 %v492, %v487
    %v653 = vpack.c.b16 %v493, %v488
    %v654 = vpack.c.b16 %v494, %v489
    %v655 = vpack.c.b16 %v495, %v490
    %v656 = vpack.c.b16 %v501, %v496
    %v657 = vpack.c.b16 %v502, %v497
    %v658 = vpack.c.b16 %v503, %v498
    %v659 = vpack.c.b16 %v504, %v499
    %v660 = vpack.c.b16 %v505, %v500
    %v661 = vpack.c.b16 %v511, %v506
    %v662 = vpack.c.b16 %v512, %v507
    %v663 = vpack.c.b16 %v513, %v508
    %v664 = vpack.c.b16 %v514, %v509
    %v665 = vpack.c.b16 %v515, %v510
    %v666 = vpack.c.b16 %v521, %v516
    %v667 = vpack.c.b16 %v522, %v517
    %v668 = vpack.c.b16 %v523, %v518
    %v669 = vpack.c.b16 %v524, %v519
    %v670 = vpack.c.b16 %v525, %v520
    %v671 = vpack.c.b16 %v531, %v526
    %v672 = vpack.c.b16 %v532, %v527
    %v673 = vpack.c.b16 %v533, %v528
    %v674 = vpack.c.b16 %v534, %v529
    %v675 = vpack.c.b16 %v535, %v530
    %v676 = vpack.c.b16 %v541, %v536
    %v677 = vpack.c.b16 %v542, %v537
    %v678 = vpack.c.b16 %v543, %v538
    %v679 = vpack.c.b16 %v544, %v539
    %v680 = vpack.c.b16 %v545, %v540
    %v681 = vpack.c.b16 %v551, %v546
    %v682 = vpack.c.b16 %v552, %v547
    %v683 = vpack.c.b16 %v553, %v548
    %v684 = vpack.c.b16 %v554, %v549
    %v685 = vpack.c.b16 %v555, %v550
    %v686 = vpack.c.b16 %v561, %v556
    %v687 = vpack.c.b16 %v562, %v557
    %v688 = vpack.c.b16 %v563, %v558
    %v689 = vpack.c.b16 %v564, %v559
    %v690 = vpack.c.b16 %v565, %v560
    %v691 = vpack.c.b16 %v571, %v566
    %v692 = vpack.c.b16 %v572, %v567
    %v693 = vpack.c.b16 %v573, %v568
    %v694 = vpack.c.b16 %v574, %v569
    %v695 = vpack.c.b16 %v575, %v570
    %v696 = vpack.c.b16 %v581, %v576
    %v697 = vpack.c.b16 %v582, %v577
    %v698 = vpack.c.b16 %v583, %v578
    %v699 = vpack.c.b16 %v584, %v579
    %v700 = vpack.c.b16 %v585, %v580
    %v701 = vpack.c.b16 %v591, %v586
    %v702 = vpack.c.b16 %v592, %v587
    %v703 = vpack.c.b16 %v593, %v588
    %v704 = vpack.c.b16 %v594, %v589
    %v705 = vpack.c.b16 %v595, %v590
    %v706 = vpack.c.b16 %v601, %v596
    %v707 = vpack.c.b16 %v602, %v597
    %v708 = vpack.c.b16 %v603, %v598
    %v709 = vpack.c.b16 %v604, %v599
    %v710 = vpack.c.b16 %v605, %v600
    %v711 = vpack.c.b16 %v611, %v606
    %v712 = vpack.c.b16 %v612, %v607
    %v713 = vpack.c.b16 %v613, %v608
    %v714 = vpack.c.b16 %v614, %v609
    %v715 = vpack.c.b16 %v615, %v610
    %v716 = vpack.c.b16 %v621, %v616
    %v717 = vpack.c.b16 %v622, %v617
    %v718 = vpack.c.b16 %v623, %v618
    %v719 = vpack.c.b16 %v624, %v619
    %v720 = vpack.c.b16 %v625, %v620
    %v721 = vpack.c.b16 %v631, %v626
    %v722 = vpack.c.b16 %v632, %v627
    %v723 = vpack.c.b16 %v633, %v628
    %v724 = vpack.c.b16 %v634, %v629
    %v725 = vpack.c.b16 %v635, %v630
    %vm816 = vcmask 261120
    %v818 = vsel %vm816, %v211, 0
    %820 = vmatprep.subr.bf16.mxu0 %v637
    %821 = vmatpush1.bf16.msra.mxu0 %v636
    %822 = vmatprep.subr.bf16.mxu0 %v642
    %823 = vmatpush1.bf16.msra.mxu0 %v641
    %824 = vmatprep.subr.bf16.mxu0 %v647
    %825 = vmatpush1.bf16.msra.mxu0 %v646
    %826 = vmatprep.subr.bf16.mxu0 %v652
    %827 = vmatpush1.bf16.msra.mxu0 %v651
    %828 = vmatprep.subr.bf16.mxu0 %v657
    %829 = vmatpush1.bf16.msra.mxu0 %v656
    %830 = vmatprep.subr.bf16.mxu0 %v662
    %831 = vmatpush1.bf16.msra.mxu0 %v661
    %832 = vmatprep.subr.bf16.mxu0 %v667
    %833 = vmatpush1.bf16.msra.mxu0 %v666
    %834 = vmatprep.subr.bf16.mxu0 %v672
    %835 = vmatpush1.bf16.msra.mxu0 %v671
    %836 = vmatprep.subr.bf16.mxu0 %v677
    %837 = vmatpush1.bf16.msra.mxu0 %v676
    %838 = vmatprep.subr.bf16.mxu0 %v682
    %839 = vmatpush1.bf16.msra.mxu0 %v681
    %840 = vmatprep.subr.bf16.mxu0 %v687
    %841 = vmatpush1.bf16.msra.mxu0 %v686
    %842 = vmatprep.subr.bf16.mxu0 %v692
    %843 = vmatpush1.bf16.msra.mxu0 %v691
    %844 = vmatprep.subr.bf16.mxu0 %v697
    %845 = vmatpush1.bf16.msra.mxu0 %v696
    %846 = vmatprep.subr.bf16.mxu0 %v702
    %847 = vmatpush1.bf16.msra.mxu0 %v701
    %848 = vmatprep.subr.bf16.mxu0 %v707
    %849 = vmatpush1.bf16.msra.mxu0 %v706
    %850 = vmatprep.subr.bf16.mxu0 %v712
    %851 = vmatpush1.bf16.msra.mxu0 %v711
    %852 = vmatprep.mubr.bf16.mxu0 %v210
    %853 = vmatmul.mubr.bf16.gmra.mrb[0].mxu0 %v209
    %v854 = vpop.f32.mrb[0].mxu0
    %v855 = vadd.f32 %v326, %v854
    %v856 = vpop.f32.mrb[0].mxu0
    %v857 = vadd.f32 %v330, %v856
    %v858 = vpop.f32.mrb[0].mxu0
    %v859 = vpop.f32.mrb[0].mxu0
    %860 = vdwg.mxu0
    %861 = vmatprep.subr.bf16.mxu0 %v717
    %862 = vmatpush1.bf16.msra.mxu0 %v716
    %863 = vmatprep.subr.bf16.mxu0 %v722
    %864 = vmatpush1.bf16.msra.mxu0 %v721
    %865 = vmatprep.subr.bf16.mxu0 0
    %866 = vmatpush1.bf16.msra.mxu0 0
    %867 = vmatprep.subr.bf16.mxu0 0
    %868 = vmatpush1.bf16.msra.mxu0 0
    %869 = vmatprep.subr.bf16.mxu0 0
    %870 = vmatpush1.bf16.msra.mxu0 0
    %871 = vmatprep.subr.bf16.mxu0 0
    %872 = vmatpush1.bf16.msra.mxu0 0
    %873 = vmatprep.subr.bf16.mxu0 0
    %874 = vmatpush1.bf16.msra.mxu0 0
    %875 = vmatprep.subr.bf16.mxu0 0
    %876 = vmatpush1.bf16.msra.mxu0 0
    %877 = vmatprep.subr.bf16.mxu0 0
    %878 = vmatpush1.bf16.msra.mxu0 0
    %879 = vmatprep.subr.bf16.mxu0 0
    %880 = vmatpush1.bf16.msra.mxu0 0
    %881 = vmatprep.subr.bf16.mxu0 0
    %882 = vmatpush1.bf16.msra.mxu0 0
    %883 = vmatprep.subr.bf16.mxu0 0
    %884 = vmatpush1.bf16.msra.mxu0 0
    %885 = vmatprep.subr.bf16.mxu0 0
    %886 = vmatpush1.bf16.msra.mxu0 0
    %887 = vmatprep.subr.bf16.mxu0 0
    %888 = vmatpush1.bf16.msra.mxu0 0
    %889 = vmatprep.subr.bf16.mxu0 0
    %890 = vmatpush1.bf16.msra.mxu0 0
    %891 = vmatprep.subr.bf16.mxu0 0
    %892 = vmatpush1.bf16.msra.mxu0 0
    %893 = vmatprep.mubr.bf16.mxu0 0
    %894 = vmatmul.mubr.bf16.gmra.mrb[0].mxu0 %v818
    %v895 = vpop.f32.mrb[0].mxu0
    %v896 = vadd.f32 %v855, %v895
    %v897 = vpop.f32.mrb[0].mxu0
    %v898 = vadd.f32 %v857, %v897
    %v899 = vpop.f32.mrb[0].mxu0
    %v900 = vpop.f32.mrb[0].mxu0
    %901 = vdwg.mxu0
    %902 = vmatprep.subr.bf16.mxu0 %v639
    %903 = vmatpush1.bf16.msra.mxu0 %v638
    %904 = vmatprep.subr.bf16.mxu0 %v644
    %905 = vmatpush1.bf16.msra.mxu0 %v643
    %906 = vmatprep.subr.bf16.mxu0 %v649
    %907 = vmatpush1.bf16.msra.mxu0 %v648
    %908 = vmatprep.subr.bf16.mxu0 %v654
    %909 = vmatpush1.bf16.msra.mxu0 %v653
    %910 = vmatprep.subr.bf16.mxu0 %v659
    %911 = vmatpush1.bf16.msra.mxu0 %v658
    %912 = vmatprep.subr.bf16.mxu0 %v664
    %913 = vmatpush1.bf16.msra.mxu0 %v663
    %914 = vmatprep.subr.bf16.mxu0 %v669
    %915 = vmatpush1.bf16.msra.mxu0 %v668
    %916 = vmatprep.subr.bf16.mxu0 %v674
    %917 = vmatpush1.bf16.msra.mxu0 %v673
    %918 = vmatprep.subr.bf16.mxu0 %v679
    %919 = vmatpush1.bf16.msra.mxu0 %v678
    %920 = vmatprep.subr.bf16.mxu0 %v684
    %921 = vmatpush1.bf16.msra.mxu0 %v683
    %922 = vmatprep.subr.bf16.mxu0 %v689
    %923 = vmatpush1.bf16.msra.mxu0 %v688
    %924 = vmatprep.subr.bf16.mxu0 %v694
    %925 = vmatpush1.bf16.msra.mxu0 %v693
    %926 = vmatprep.subr.bf16.mxu0 %v699
    %927 = vmatpush1.bf16.msra.mxu0 %v698
    %928 = vmatprep.subr.bf16.mxu0 %v704
    %929 = vmatpush1.bf16.msra.mxu0 %v703
    %930 = vmatprep.subr.bf16.mxu0 %v709
    %931 = vmatpush1.bf16.msra.mxu0 %v708
    %932 = vmatprep.subr.bf16.mxu0 %v714
    %933 = vmatpush1.bf16.msra.mxu0 %v713
    %934 = vmatprep.mubr.bf16.mxu0 %v210
    %935 = vmatmul.mubr.bf16.gmra.mrb[0].mxu0 %v209
    %v936 = vpop.f32.mrb[0].mxu0
    %v937 = vadd.f32 %v334, %v936
    %v938 = vpop.f32.mrb[0].mxu0
    %v939 = vadd.f32 %v338, %v938
    %v940 = vpop.f32.mrb[0].mxu0
    %v941 = vpop.f32.mrb[0].mxu0
    %942 = vdwg.mxu0
    %943 = vmatprep.subr.bf16.mxu0 %v719
    %944 = vmatpush1.bf16.msra.mxu0 %v718
    %945 = vmatprep.subr.bf16.mxu0 %v724
    %946 = vmatpush1.bf16.msra.mxu0 %v723
    %947 = vmatprep.subr.bf16.mxu0 0
    %948 = vmatpush1.bf16.msra.mxu0 0
    %949 = vmatprep.subr.bf16.mxu0 0
    %950 = vmatpush1.bf16.msra.mxu0 0
    %951 = vmatprep.subr.bf16.mxu0 0
    %952 = vmatpush1.bf16.msra.mxu0 0
    %953 = vmatprep.subr.bf16.mxu0 0
    %954 = vmatpush1.bf16.msra.mxu0 0
    %955 = vmatprep.subr.bf16.mxu0 0
    %956 = vmatpush1.bf16.msra.mxu0 0
    %957 = vmatprep.subr.bf16.mxu0 0
    %958 = vmatpush1.bf16.msra.mxu0 0
    %959 = vmatprep.subr.bf16.mxu0 0
    %960 = vmatpush1.bf16.msra.mxu0 0
    %961 = vmatprep.subr.bf16.mxu0 0
    %962 = vmatpush1.bf16.msra.mxu0 0
    %963 = vmatprep.subr.bf16.mxu0 0
    %964 = vmatpush1.bf16.msra.mxu0 0
    %965 = vmatprep.subr.bf16.mxu0 0
    %966 = vmatpush1.bf16.msra.mxu0 0
    %967 = vmatprep.subr.bf16.mxu0 0
    %968 = vmatpush1.bf16.msra.mxu0 0
    %969 = vmatprep.subr.bf16.mxu0 0
    %970 = vmatpush1.bf16.msra.mxu0 0
    %971 = vmatprep.subr.bf16.mxu0 0
    %972 = vmatpush1.bf16.msra.mxu0 0
    %973 = vmatprep.subr.bf16.mxu0 0
    %974 = vmatpush1.bf16.msra.mxu0 0
    %975 = vmatprep.mubr.bf16.mxu0 0
    %976 = vmatmul.mubr.bf16.gmra.mrb[0].mxu0 %v818
    %v977 = vpop.f32.mrb[0].mxu0
    %v978 = vadd.f32 %v937, %v977
    %v979 = vpop.f32.mrb[0].mxu0
    %v980 = vadd.f32 %v939, %v979
    %v981 = vpop.f32.mrb[0].mxu0
    %v982 = vpop.f32.mrb[0].mxu0
    %983 = vdwg.mxu0
    %984 = vmatprep.subr.bf16.mxu0 0
    %985 = vmatpush1.bf16.msra.mxu0 %v640
    %986 = vmatprep.subr.bf16.mxu0 0
    %987 = vmatpush1.bf16.msra.mxu0 %v645
    %988 = vmatprep.subr.bf16.mxu0 0
    %989 = vmatpush1.bf16.msra.mxu0 %v650
    %990 = vmatprep.subr.bf16.mxu0 0
    %991 = vmatpush1.bf16.msra.mxu0 %v655
    %992 = vmatprep.subr.bf16.mxu0 0
    %993 = vmatpush1.bf16.msra.mxu0 %v660
    %994 = vmatprep.subr.bf16.mxu0 0
    %995 = vmatpush1.bf16.msra.mxu0 %v665
    %996 = vmatprep.subr.bf16.mxu0 0
    %997 = vmatpush1.bf16.msra.mxu0 %v670
    %998 = vmatprep.subr.bf16.mxu0 0
    %999 = vmatpush1.bf16.msra.mxu0 %v675
    %1000 = vmatprep.subr.bf16.mxu0 0
    %1001 = vmatpush1.bf16.msra.mxu0 %v680
    %1002 = vmatprep.subr.bf16.mxu0 0
    %1003 = vmatpush1.bf16.msra.mxu0 %v685
    %1004 = vmatprep.subr.bf16.mxu0 0
    %1005 = vmatpush1.bf16.msra.mxu0 %v690
    %1006 = vmatprep.subr.bf16.mxu0 0
    %1007 = vmatpush1.bf16.msra.mxu0 %v695
    %1008 = vmatprep.subr.bf16.mxu0 0
    %1009 = vmatpush1.bf16.msra.mxu0 %v700
    %1010 = vmatprep.subr.bf16.mxu0 0
    %1011 = vmatpush1.bf16.msra.mxu0 %v705
    %1012 = vmatprep.subr.bf16.mxu0 0
    %1013 = vmatpush1.bf16.msra.mxu0 %v710
    %1014 = vmatprep.subr.bf16.mxu0 0
    %1015 = vmatpush1.bf16.msra.mxu0 %v715
    %1016 = vmatprep.mubr.bf16.mxu0 %v210
    %1017 = vmatmul.mubr.bf16.gmra.mrb[0].mxu0 %v209
    %v1018 = vpop.f32.mrb[0].mxu0
    %v1019 = vadd.f32 %v342, %v1018
    %v1020 = vpop.f32.mrb[0].mxu0
    %v1021 = vpop.f32.mrb[0].mxu0
    %v1022 = vpop.f32.mrb[0].mxu0
    %1023 = vdwg.mxu0
    %1024 = vmatprep.subr.bf16.mxu0 0
    %1025 = vmatpush1.bf16.msra.mxu0 %v720
    %1026 = vmatprep.subr.bf16.mxu0 0
    %1027 = vmatpush1.bf16.msra.mxu0 %v725
    %1028 = vmatprep.subr.bf16.mxu0 0
    %1029 = vmatpush1.bf16.msra.mxu0 0
    %1030 = vmatprep.subr.bf16.mxu0 0
    %1031 = vmatpush1.bf16.msra.mxu0 0
    %1032 = vmatprep.subr.bf16.mxu0 0
    %1033 = vmatpush1.bf16.msra.mxu0 0
    %1034 = vmatprep.subr.bf16.mxu0 0
    %1035 = vmatpush1.bf16.msra.mxu0 0
    %1036 = vmatprep.subr.bf16.mxu0 0
    %1037 = vmatpush1.bf16.msra.mxu0 0
    %1038 = vmatprep.subr.bf16.mxu0 0
    %1039 = vmatpush1.bf16.msra.mxu0 0
    %1040 = vmatprep.subr.bf16.mxu0 0
    %1041 = vmatpush1.bf16.msra.mxu0 0
    %1042 = vmatprep.subr.bf16.mxu0 0
    %1043 = vmatpush1.bf16.msra.mxu0 0
    %1044 = vmatprep.subr.bf16.mxu0 0
    %1045 = vmatpush1.bf16.msra.mxu0 0
    %1046 = vmatprep.subr.bf16.mxu0 0
    %1047 = vmatpush1.bf16.msra.mxu0 0
    %1048 = vmatprep.subr.bf16.mxu0 0
    %1049 = vmatpush1.bf16.msra.mxu0 0
    %1050 = vmatprep.subr.bf16.mxu0 0
    %1051 = vmatpush1.bf16.msra.mxu0 0
    %1052 = vmatprep.subr.bf16.mxu0 0
    %1053 = vmatpush1.bf16.msra.mxu0 0
    %1054 = vmatprep.subr.bf16.mxu0 0
    %1055 = vmatpush1.bf16.msra.mxu0 0
    %1056 = vmatprep.mubr.bf16.mxu0 0
    %1057 = vmatmul.mubr.bf16.gmra.mrb[0].mxu0 %v818
    %v1058 = vpop.f32.mrb[0].mxu0
    %v1059 = vadd.f32 %v1019, %v1058
    %v1060 = vpop.f32.mrb[0].mxu0
    %v1061 = vpop.f32.mrb[0].mxu0
    %v1062 = vpop.f32.mrb[0].mxu0
    %1063 = vdwg.mxu0
    %vm1064 = vcmp.gt.f32.partialorder %v896, 0.0
    %vm1065 = vcmp.gt.f32.partialorder %v898, 0.0
    %vm1066 = vcmp.gt.f32.partialorder %v978, 0.0
    %vm1067 = vcmp.gt.f32.partialorder %v980, 0.0
    %vm1068 = vcmp.gt.f32.partialorder %v1059, 0.0
    %v1069 = vmul.f32 %v896, 0.2
    %v1070 = vmul.f32 %v898, 0.2
    %v1071 = vmul.f32 %v978, 0.2
    %v1072 = vmul.f32 %v980, 0.2
    %v1073 = vmul.f32 %v1059, 0.2
    %v1074 = vsel %vm1064, %v896, %v1069
    %v1075 = vsel %vm1065, %v898, %v1070
    %v1076 = vsel %vm1066, %v978, %v1071
    %v1077 = vsel %vm1067, %v980, %v1072
    %v1078 = vsel %vm1068, %v1059, %v1073
    %v1079 = vpack.c.bf16 %v1074, %v1074
    %v1080 = vpack.c.bf16 %v1075, %v1075
    %v1081 = vpack.c.bf16 %v1076, %v1076
    %v1082 = vpack.c.bf16 %v1077, %v1077
    %v1083 = vpack.c.bf16 %v1078, %v1078
    %s1084 = scalar_lea.vmem [#allocation7], 2
    %v1085 = vld [vmem:[%s1084] ss:$4 sm:$0x1f]
    %v1086 = vld [vmem:[#allocation4] sm:$0xff]
    %v1087 = vld [vmem:[#allocation4 + $0x8] sm:$0xff]
    %v1088 = vld [vmem:[#allocation4 + $0x10] sm:$0xf]
    %v1089 = vld [vmem:[#allocation4 + $0x14] sm:$0xff]
    %v1090 = vld [vmem:[#allocation4 + $0x1c] sm:$0xff]
    %v1091 = vld [vmem:[#allocation4 + $0x24] sm:$0xf]
    %v1092 = vld [vmem:[#allocation4 + $0x28] sm:$0xff]
    %v1093 = vld [vmem:[#allocation4 + $0x30] sm:$0xff]
    %v1094 = vld [vmem:[#allocation4 + $0x38] sm:$0xf]
    %v1095 = vld [vmem:[#allocation4 + $0x3c] sm:$0xff]
    %v1096 = vld [vmem:[#allocation4 + $0x44] sm:$0xff]
    %v1097 = vld [vmem:[#allocation4 + $0x4c] sm:$0xf]
    %v1098 = vld [vmem:[#allocation4 + $0x50] sm:$0xff]
    %v1099 = vld [vmem:[#allocation4 + $0x58] sm:$0xff]
    %v1100 = vld [vmem:[#allocation4 + $0x60] sm:$0xf]
    %v1101 = vld [vmem:[#allocation4 + $0x64] sm:$0xff]
    %v1102 = vld [vmem:[#allocation4 + $0x6c] sm:$0xff]
    %v1103 = vld [vmem:[#allocation4 + $0x74] sm:$0xf]
    %v1104 = vld [vmem:[#allocation4 + $0x78] sm:$0xff]
    %v1105 = vld [vmem:[#allocation4 + $0x80] sm:$0xff]
    %v1106 = vld [vmem:[#allocation4 + $0x88] sm:$0xf]
    %v1107 = vld [vmem:[#allocation4 + $0x8c] sm:$0xff]
    %v1108 = vld [vmem:[#allocation4 + $0x94] sm:$0xff]
    %v1109 = vld [vmem:[#allocation4 + $0x9c] sm:$0xf]
    %v1110 = vld [vmem:[#allocation4 + $0xa0] sm:$0xff]
    %v1111 = vld [vmem:[#allocation4 + $0xa8] sm:$0xff]
    %v1112 = vld [vmem:[#allocation4 + $0xb0] sm:$0xf]
    %v1113 = vld [vmem:[#allocation4 + $0xb4] sm:$0xff]
    %v1114 = vld [vmem:[#allocation4 + $0xbc] sm:$0xff]
    %v1115 = vld [vmem:[#allocation4 + $0xc4] sm:$0xf]
    %v1116 = vld [vmem:[#allocation4 + $0xc8] sm:$0xff]
    %v1117 = vld [vmem:[#allocation4 + $0xd0] sm:$0xff]
    %v1118 = vld [vmem:[#allocation4 + $0xd8] sm:$0xf]
    %v1119 = vld [vmem:[#allocation4 + $0xdc] sm:$0xff]
    %v1120 = vld [vmem:[#allocation4 + $0xe4] sm:$0xff]
    %v1121 = vld [vmem:[#allocation4 + $0xec] sm:$0xf]
    %v1122 = vld [vmem:[#allocation4 + $0xf0] sm:$0xff]
    %v1123 = vld [vmem:[#allocation4 + $0xf8] sm:$0xff]
    %v1124 = vld [vmem:[#allocation4 + $0x100] sm:$0xf]
    %v1125 = vld [vmem:[#allocation4 + $0x104] sm:$0xff]
    %v1126 = vld [vmem:[#allocation4 + $0x10c] sm:$0xff]
    %v1127 = vld [vmem:[#allocation4 + $0x114] sm:$0xf]
    %v1128 = vld [vmem:[#allocation4 + $0x118] sm:$0xff]
    %v1129 = vld [vmem:[#allocation4 + $0x120] sm:$0xff]
    %v1130 = vld [vmem:[#allocation4 + $0x128] sm:$0xf]
    %v1131 = vld [vmem:[#allocation4 + $0x12c] sm:$0xff]
    %v1132 = vld [vmem:[#allocation4 + $0x134] sm:$0xff]
    %v1133 = vld [vmem:[#allocation4 + $0x13c] sm:$0xf]
    %v1134 = vld [vmem:[#allocation4 + $0x140] sm:$0xff]
    %v1135 = vld [vmem:[#allocation4 + $0x148] sm:$0xff]
    %v1136 = vld [vmem:[#allocation4 + $0x150] sm:$0xf]
    %v1137 = vld [vmem:[#allocation4 + $0x154] sm:$0xff]
    %v1138 = vld [vmem:[#allocation4 + $0x15c] sm:$0xff]
    %v1139 = vld [vmem:[#allocation4 + $0x164] sm:$0xf]
    %v1140 = vld [vmem:[#allocation4 + $0x168] sm:$0xff]
    %v1141 = vld [vmem:[#allocation4 + $0x170] sm:$0xff]
    %v1142 = vld [vmem:[#allocation4 + $0x178] sm:$0xf]
    %v1143 = vld [vmem:[#allocation4 + $0x17c] sm:$0xff]
    %v1144 = vld [vmem:[#allocation4 + $0x184] sm:$0xff]
    %v1145 = vld [vmem:[#allocation4 + $0x18c] sm:$0xf]
    %v1146 = vld [vmem:[#allocation4 + $0x190] sm:$0xff]
    %v1147 = vld [vmem:[#allocation4 + $0x198] sm:$0xff]
    %v1148 = vld [vmem:[#allocation4 + $0x1a0] sm:$0xf]
    %v1149 = vld [vmem:[#allocation4 + $0x1a4] sm:$0xff]
    %v1150 = vld [vmem:[#allocation4 + $0x1ac] sm:$0xff]
    %v1151 = vld [vmem:[#allocation4 + $0x1b4] sm:$0xf]
    %v1152 = vld [vmem:[#allocation4 + $0x1b8] sm:$0xff]
    %v1153 = vld [vmem:[#allocation4 + $0x1c0] sm:$0xff]
    %v1154 = vld [vmem:[#allocation4 + $0x1c8] sm:$0xf]
    %v1155 = vld [vmem:[#allocation4 + $0x1cc] sm:$0xff]
    %v1156 = vld [vmem:[#allocation4 + $0x1d4] sm:$0xff]
    %v1157 = vld [vmem:[#allocation4 + $0x1dc] sm:$0xf]
    %v1158 = vld [vmem:[#allocation4 + $0x1e0] sm:$0xff]
    %v1159 = vld [vmem:[#allocation4 + $0x1e8] sm:$0xff]
    %v1160 = vld [vmem:[#allocation4 + $0x1f0] sm:$0xf]
    %v1161 = vld [vmem:[#allocation4 + $0x1f4] sm:$0xff]
    %v1162 = vld [vmem:[#allocation4 + $0x1fc] sm:$0xff]
    %v1163 = vld [vmem:[#allocation4 + $0x204] sm:$0xf]
    %v1164 = vld [vmem:[#allocation4 + $0x208] sm:$0xff]
    %v1165 = vld [vmem:[#allocation4 + $0x210] sm:$0xff]
    %v1166 = vld [vmem:[#allocation4 + $0x218] sm:$0xf]
    %v1167 = vld [vmem:[#allocation4 + $0x21c] sm:$0xff]
    %v1168 = vld [vmem:[#allocation4 + $0x224] sm:$0xff]
    %v1169 = vld [vmem:[#allocation4 + $0x22c] sm:$0xf]
    %v1170 = vld [vmem:[#allocation4 + $0x230] sm:$0xff]
    %v1171 = vld [vmem:[#allocation4 + $0x238] sm:$0xff]
    %v1172 = vld [vmem:[#allocation4 + $0x240] sm:$0xf]
    %v1173 = vld [vmem:[#allocation4 + $0x244] sm:$0xff]
    %v1174 = vld [vmem:[#allocation4 + $0x24c] sm:$0xff]
    %v1175 = vld [vmem:[#allocation4 + $0x254] sm:$0xf]
    %v1176 = vld [vmem:[#allocation4 + $0x258] sm:$0xff]
    %v1177 = vld [vmem:[#allocation4 + $0x260] sm:$0xff]
    %v1178 = vld [vmem:[#allocation4 + $0x268] sm:$0xf]
    %v1179 = vld [vmem:[#allocation4 + $0x26c] sm:$0xff]
    %v1180 = vld [vmem:[#allocation4 + $0x274] sm:$0xff]
    %v1181 = vld [vmem:[#allocation4 + $0x27c] sm:$0xf]
    %v1182 = vld [vmem:[#allocation4 + $0x280] sm:$0xff]
    %v1183 = vld [vmem:[#allocation4 + $0x288] sm:$0xff]
    %v1184 = vld [vmem:[#allocation4 + $0x290] sm:$0xf]
    %v1185 = vld [vmem:[#allocation4 + $0x294] sm:$0xff]
    %v1186 = vld [vmem:[#allocation4 + $0x29c] sm:$0xff]
    %v1187 = vld [vmem:[#allocation4 + $0x2a4] sm:$0xf]
    %v1188 = vld [vmem:[#allocation4 + $0x2a8] sm:$0xff]
    %v1189 = vld [vmem:[#allocation4 + $0x2b0] sm:$0xff]
    %v1190 = vld [vmem:[#allocation4 + $0x2b8] sm:$0xf]
    %v1191 = vld [vmem:[#allocation4 + $0x2bc] sm:$0xff]
    %v1192 = vld [vmem:[#allocation4 + $0x2c4] sm:$0xff]
    %v1193 = vld [vmem:[#allocation4 + $0x2cc] sm:$0xf]
    %v1194 = vld [vmem:[#allocation4 + $0x2d0] sm:$0xff]
    %v1195 = vld [vmem:[#allocation4 + $0x2d8] sm:$0xff]
    %v1196 = vld [vmem:[#allocation4 + $0x2e0] sm:$0xf]
    %v1197 = vld [vmem:[#allocation4 + $0x2e4] sm:$0xff]
    %v1198 = vld [vmem:[#allocation4 + $0x2ec] sm:$0xff]
    %v1199 = vld [vmem:[#allocation4 + $0x2f4] sm:$0xf]
    %v1200 = vld [vmem:[#allocation4 + $0x2f8] sm:$0xff]
    %v1201 = vld [vmem:[#allocation4 + $0x300] sm:$0xff]
    %v1202 = vld [vmem:[#allocation4 + $0x308] sm:$0xf]
    %v1203 = vld [vmem:[#allocation4 + $0x30c] sm:$0xff]
    %v1204 = vld [vmem:[#allocation4 + $0x314] sm:$0xff]
    %v1205 = vld [vmem:[#allocation4 + $0x31c] sm:$0xf]
    %v1206 = vld [vmem:[#allocation4 + $0x320] sm:$0xff]
    %v1207 = vld [vmem:[#allocation4 + $0x328] sm:$0xff]
    %v1208 = vld [vmem:[#allocation4 + $0x330] sm:$0xf]
    %v1209 = vld [vmem:[#allocation4 + $0x334] sm:$0xff]
    %v1210 = vld [vmem:[#allocation4 + $0x33c] sm:$0xff]
    %v1211 = vld [vmem:[#allocation4 + $0x344] sm:$0xf]
    %v1212 = vld [vmem:[#allocation4 + $0x348] sm:$0xff]
    %v1213 = vld [vmem:[#allocation4 + $0x350] sm:$0xff]
    %v1214 = vld [vmem:[#allocation4 + $0x358] sm:$0xf]
    %v1215 = vld [vmem:[#allocation4 + $0x35c] sm:$0xff]
    %v1216 = vld [vmem:[#allocation4 + $0x364] sm:$0xff]
    %v1217 = vld [vmem:[#allocation4 + $0x36c] sm:$0xf]
    %v1218 = vld [vmem:[#allocation4 + $0x370] sm:$0xff]
    %v1219 = vld [vmem:[#allocation4 + $0x378] sm:$0xff]
    %v1220 = vld [vmem:[#allocation4 + $0x380] sm:$0xf]
    %v1221 = vld [vmem:[#allocation4 + $0x384] sm:$0xff]
    %v1222 = vld [vmem:[#allocation4 + $0x38c] sm:$0xff]
    %v1223 = vld [vmem:[#allocation4 + $0x394] sm:$0xf]
    %v1224 = vld [vmem:[#allocation4 + $0x398] sm:$0xff]
    %v1225 = vld [vmem:[#allocation4 + $0x3a0] sm:$0xff]
    %v1226 = vld [vmem:[#allocation4 + $0x3a8] sm:$0xf]
    %v1227 = vld [vmem:[#allocation4 + $0x3ac] sm:$0xff]
    %v1228 = vld [vmem:[#allocation4 + $0x3b4] sm:$0xff]
    %v1229 = vld [vmem:[#allocation4 + $0x3bc] sm:$0xf]
    %v1230 = vld [vmem:[#allocation4 + $0x3c0] sm:$0xff]
    %v1231 = vld [vmem:[#allocation4 + $0x3c8] sm:$0xff]
    %v1232 = vld [vmem:[#allocation4 + $0x3d0] sm:$0xf]
    %v1233 = vld [vmem:[#allocation4 + $0x3d4] sm:$0xff]
    %v1234 = vld [vmem:[#allocation4 + $0x3dc] sm:$0xff]
    %v1235 = vld [vmem:[#allocation4 + $0x3e4] sm:$0xf]
    %v1236 = vld [vmem:[#allocation4 + $0x3e8] sm:$0xff]
    %v1237 = vld [vmem:[#allocation4 + $0x3f0] sm:$0xff]
    %v1238 = vld [vmem:[#allocation4 + $0x3f8] sm:$0xf]
    %v1239 = vld [vmem:[#allocation4 + $0x3fc] sm:$0xff]
    %v1240 = vld [vmem:[#allocation4 + $0x404] sm:$0xff]
    %v1241 = vld [vmem:[#allocation4 + $0x40c] sm:$0xf]
    %v1242 = vld [vmem:[#allocation4 + $0x410] sm:$0xff]
    %v1243 = vld [vmem:[#allocation4 + $0x418] sm:$0xff]
    %v1244 = vld [vmem:[#allocation4 + $0x420] sm:$0xf]
    %v1245 = vld [vmem:[#allocation4 + $0x424] sm:$0xff]
    %v1246 = vld [vmem:[#allocation4 + $0x42c] sm:$0xff]
    %v1247 = vld [vmem:[#allocation4 + $0x434] sm:$0xf]
    %v1248 = vld [vmem:[#allocation4 + $0x438] sm:$0xff]
    %v1249 = vld [vmem:[#allocation4 + $0x440] sm:$0xff]
    %v1250 = vld [vmem:[#allocation4 + $0x448] sm:$0xf]
    %v1251 = vld [vmem:[#allocation4 + $0x44c] sm:$0xff]
    %v1252 = vld [vmem:[#allocation4 + $0x454] sm:$0xff]
    %v1253 = vld [vmem:[#allocation4 + $0x45c] sm:$0xf]
    %v1254 = vld [vmem:[#allocation4 + $0x460] sm:$0xff]
    %v1255 = vld [vmem:[#allocation4 + $0x468] sm:$0xff]
    %v1256 = vld [vmem:[#allocation4 + $0x470] sm:$0xf]
    %v1257 = vld [vmem:[#allocation4 + $0x474] sm:$0xff]
    %v1258 = vld [vmem:[#allocation4 + $0x47c] sm:$0xff]
    %v1259 = vld [vmem:[#allocation4 + $0x484] sm:$0xf]
    %v1260 = vld [vmem:[#allocation4 + $0x488] sm:$0xff]
    %v1261 = vld [vmem:[#allocation4 + $0x490] sm:$0xff]
    %v1262 = vld [vmem:[#allocation4 + $0x498] sm:$0xf]
    %v1263 = vld [vmem:[#allocation4 + $0x49c] sm:$0xff]
    %v1264 = vld [vmem:[#allocation4 + $0x4a4] sm:$0xff]
    %v1265 = vld [vmem:[#allocation4 + $0x4ac] sm:$0xf]
    %v1266 = vld [vmem:[#allocation4 + $0x4b0] sm:$0xff]
    %v1267 = vld [vmem:[#allocation4 + $0x4b8] sm:$0xff]
    %v1268 = vld [vmem:[#allocation4 + $0x4c0] sm:$0xf]
    %v1269 = vld [vmem:[#allocation4 + $0x4c4] sm:$0xff]
    %v1270 = vld [vmem:[#allocation4 + $0x4cc] sm:$0xff]
    %v1271 = vld [vmem:[#allocation4 + $0x4d4] sm:$0xf]
    %v1272 = vld [vmem:[#allocation4 + $0x4d8] sm:$0xff]
    %v1273 = vld [vmem:[#allocation4 + $0x4e0] sm:$0xff]
    %v1274 = vld [vmem:[#allocation4 + $0x4e8] sm:$0xf]
    %v1275 = vld [vmem:[#allocation4 + $0x4ec] sm:$0xff]
    %v1276 = vld [vmem:[#allocation4 + $0x4f4] sm:$0xff]
    %v1277 = vld [vmem:[#allocation4 + $0x4fc] sm:$0xf]
    %v1278 = vld [vmem:[#allocation4 + $0x500] sm:$0xff]
    %v1279 = vld [vmem:[#allocation4 + $0x508] sm:$0xff]
    %v1280 = vld [vmem:[#allocation4 + $0x510] sm:$0xf]
    %v1281 = vld [vmem:[#allocation4 + $0x514] sm:$0xff]
    %v1282 = vld [vmem:[#allocation4 + $0x51c] sm:$0xff]
    %v1283 = vld [vmem:[#allocation4 + $0x524] sm:$0xf]
    %v1284 = vld [vmem:[#allocation4 + $0x528] sm:$0xff]
    %v1285 = vld [vmem:[#allocation4 + $0x530] sm:$0xff]
    %v1286 = vld [vmem:[#allocation4 + $0x538] sm:$0xf]
    %v1287 = vld [vmem:[#allocation4 + $0x53c] sm:$0xff]
    %v1288 = vld [vmem:[#allocation4 + $0x544] sm:$0xff]
    %v1289 = vld [vmem:[#allocation4 + $0x54c] sm:$0xf]
    %v1290 = vld [vmem:[#allocation4 + $0x550] sm:$0xff]
    %v1291 = vld [vmem:[#allocation4 + $0x558] sm:$0xff]
    %v1292 = vld [vmem:[#allocation4 + $0x560] sm:$0xf]
    %v1293 = vld [vmem:[#allocation4 + $0x564] sm:$0xff]
    %v1294 = vld [vmem:[#allocation4 + $0x56c] sm:$0xff]
    %v1295 = vld [vmem:[#allocation4 + $0x574] sm:$0xf]
    %v1296 = vld [vmem:[#allocation4 + $0x578] sm:$0xff]
    %v1297 = vld [vmem:[#allocation4 + $0x580] sm:$0xff]
    %v1298 = vld [vmem:[#allocation4 + $0x588] sm:$0xf]
    %v1299 = vld [vmem:[#allocation4 + $0x58c] sm:$0xff]
    %v1300 = vld [vmem:[#allocation4 + $0x594] sm:$0xff]
    %v1301 = vld [vmem:[#allocation4 + $0x59c] sm:$0xf]
    %v1303 = vlaneseq
    %v1304 = vshrl.u32 %v1303, 7
    %v1305 = vsub.s32 0, %v1304
    %v1306 = vrot.slane %v1085, %v1305
    %v1307 = vlaneseq
    %v1308 = vshrl.u32 %v1307, 7
    %v1309 = vsub.s32 1, %v1308
    %v1310 = vrot.slane %v1085, %v1309
    %v1311 = vlaneseq
    %v1312 = vshrl.u32 %v1311, 7
    %v1313 = vsub.s32 2, %v1312
    %v1314 = vrot.slane %v1085, %v1313
    %v1315 = vlaneseq
    %v1316 = vshrl.u32 %v1315, 7
    %v1317 = vsub.s32 3, %v1316
    %v1318 = vrot.slane %v1085, %v1317
    %v1319 = vlaneseq
    %v1320 = vshrl.u32 %v1319, 7
    %v1321 = vsub.s32 4, %v1320
    %v1322 = vrot.slane %v1085, %v1321
    %v1544 = vunpack.c.l.b16 %v1086
    %v1545 = vunpack.c.h.b16 %v1086
    %v1546 = vunpack.c.l.b16 %v1087
    %v1547 = vunpack.c.h.b16 %v1087
    %v1548 = vunpack.c.l.b16 %v1088
    %v1549 = vunpack.c.l.b16 %v1089
    %v1550 = vunpack.c.h.b16 %v1089
    %v1551 = vunpack.c.l.b16 %v1090
    %v1552 = vunpack.c.h.b16 %v1090
    %v1553 = vunpack.c.l.b16 %v1091
    %v1554 = vunpack.c.l.b16 %v1092
    %v1555 = vunpack.c.h.b16 %v1092
    %v1556 = vunpack.c.l.b16 %v1093
    %v1557 = vunpack.c.h.b16 %v1093
    %v1558 = vunpack.c.l.b16 %v1094
    %v1559 = vunpack.c.l.b16 %v1095
    %v1560 = vunpack.c.h.b16 %v1095
    %v1561 = vunpack.c.l.b16 %v1096
    %v1562 = vunpack.c.h.b16 %v1096
    %v1563 = vunpack.c.l.b16 %v1097
    %v1564 = vunpack.c.l.b16 %v1098
    %v1565 = vunpack.c.h.b16 %v1098
    %v1566 = vunpack.c.l.b16 %v1099
    %v1567 = vunpack.c.h.b16 %v1099
    %v1568 = vunpack.c.l.b16 %v1100
    %v1569 = vunpack.c.l.b16 %v1101
    %v1570 = vunpack.c.h.b16 %v1101
    %v1571 = vunpack.c.l.b16 %v1102
    %v1572 = vunpack.c.h.b16 %v1102
    %v1573 = vunpack.c.l.b16 %v1103
    %v1574 = vunpack.c.l.b16 %v1104
    %v1575 = vunpack.c.h.b16 %v1104
    %v1576 = vunpack.c.l.b16 %v1105
    %v1577 = vunpack.c.h.b16 %v1105
    %v1578 = vunpack.c.l.b16 %v1106
    %v1579 = vunpack.c.l.b16 %v1107
    %v1580 = vunpack.c.h.b16 %v1107
    %v1581 = vunpack.c.l.b16 %v1108
    %v1582 = vunpack.c.h.b16 %v1108
    %v1583 = vunpack.c.l.b16 %v1109
    %v1584 = vunpack.c.l.b16 %v1110
    %v1585 = vunpack.c.h.b16 %v1110
    %v1586 = vunpack.c.l.b16 %v1111
    %v1587 = vunpack.c.h.b16 %v1111
    %v1588 = vunpack.c.l.b16 %v1112
    %v1589 = vunpack.c.l.b16 %v1113
    %v1590 = vunpack.c.h.b16 %v1113
    %v1591 = vunpack.c.l.b16 %v1114
    %v1592 = vunpack.c.h.b16 %v1114
    %v1593 = vunpack.c.l.b16 %v1115
    %v1594 = vunpack.c.l.b16 %v1116
    %v1595 = vunpack.c.h.b16 %v1116
    %v1596 = vunpack.c.l.b16 %v1117
    %v1597 = vunpack.c.h.b16 %v1117
    %v1598 = vunpack.c.l.b16 %v1118
    %v1599 = vunpack.c.l.b16 %v1119
    %v1600 = vunpack.c.h.b16 %v1119
    %v1601 = vunpack.c.l.b16 %v1120
    %v1602 = vunpack.c.h.b16 %v1120
    %v1603 = vunpack.c.l.b16 %v1121
    %v1604 = vunpack.c.l.b16 %v1122
    %v1605 = vunpack.c.h.b16 %v1122
    %v1606 = vunpack.c.l.b16 %v1123
    %v1607 = vunpack.c.h.b16 %v1123
    %v1608 = vunpack.c.l.b16 %v1124
    %v1609 = vunpack.c.l.b16 %v1125
    %v1610 = vunpack.c.h.b16 %v1125
    %v1611 = vunpack.c.l.b16 %v1126
    %v1612 = vunpack.c.h.b16 %v1126
    %v1613 = vunpack.c.l.b16 %v1127
    %v1614 = vunpack.c.l.b16 %v1128
    %v1615 = vunpack.c.h.b16 %v1128
    %v1616 = vunpack.c.l.b16 %v1129
    %v1617 = vunpack.c.h.b16 %v1129
    %v1618 = vunpack.c.l.b16 %v1130
    %v1619 = vunpack.c.l.b16 %v1131
    %v1620 = vunpack.c.h.b16 %v1131
    %v1621 = vunpack.c.l.b16 %v1132
    %v1622 = vunpack.c.h.b16 %v1132
    %v1623 = vunpack.c.l.b16 %v1133
    %v1624 = vunpack.c.l.b16 %v1134
    %v1625 = vunpack.c.h.b16 %v1134
    %v1626 = vunpack.c.l.b16 %v1135
    %v1627 = vunpack.c.h.b16 %v1135
    %v1628 = vunpack.c.l.b16 %v1136
    %v1629 = vunpack.c.l.b16 %v1137
    %v1630 = vunpack.c.h.b16 %v1137
    %v1631 = vunpack.c.l.b16 %v1138
    %v1632 = vunpack.c.h.b16 %v1138
    %v1633 = vunpack.c.l.b16 %v1139
    %v1634 = vunpack.c.l.b16 %v1140
    %v1635 = vunpack.c.h.b16 %v1140
    %v1636 = vunpack.c.l.b16 %v1141
    %v1637 = vunpack.c.h.b16 %v1141
    %v1638 = vunpack.c.l.b16 %v1142
    %v1639 = vunpack.c.l.b16 %v1143
    %v1640 = vunpack.c.h.b16 %v1143
    %v1641 = vunpack.c.l.b16 %v1144
    %v1642 = vunpack.c.h.b16 %v1144
    %v1643 = vunpack.c.l.b16 %v1145
    %v1644 = vunpack.c.l.b16 %v1146
    %v1645 = vunpack.c.h.b16 %v1146
    %v1646 = vunpack.c.l.b16 %v1147
    %v1647 = vunpack.c.h.b16 %v1147
    %v1648 = vunpack.c.l.b16 %v1148
    %v1649 = vunpack.c.l.b16 %v1149
    %v1650 = vunpack.c.h.b16 %v1149
    %v1651 = vunpack.c.l.b16 %v1150
    %v1652 = vunpack.c.h.b16 %v1150
    %v1653 = vunpack.c.l.b16 %v1151
    %v1654 = vunpack.c.l.b16 %v1152
    %v1655 = vunpack.c.h.b16 %v1152
    %v1656 = vunpack.c.l.b16 %v1153
    %v1657 = vunpack.c.h.b16 %v1153
    %v1658 = vunpack.c.l.b16 %v1154
    %v1659 = vunpack.c.l.b16 %v1155
    %v1660 = vunpack.c.h.b16 %v1155
    %v1661 = vunpack.c.l.b16 %v1156
    %v1662 = vunpack.c.h.b16 %v1156
    %v1663 = vunpack.c.l.b16 %v1157
    %v1664 = vunpack.c.l.b16 %v1158
    %v1665 = vunpack.c.h.b16 %v1158
    %v1666 = vunpack.c.l.b16 %v1159
    %v1667 = vunpack.c.h.b16 %v1159
    %v1668 = vunpack.c.l.b16 %v1160
    %v1669 = vunpack.c.l.b16 %v1161
    %v1670 = vunpack.c.h.b16 %v1161
    %v1671 = vunpack.c.l.b16 %v1162
    %v1672 = vunpack.c.h.b16 %v1162
    %v1673 = vunpack.c.l.b16 %v1163
    %v1674 = vunpack.c.l.b16 %v1164
    %v1675 = vunpack.c.h.b16 %v1164
    %v1676 = vunpack.c.l.b16 %v1165
    %v1677 = vunpack.c.h.b16 %v1165
    %v1678 = vunpack.c.l.b16 %v1166
    %v1679 = vunpack.c.l.b16 %v1167
    %v1680 = vunpack.c.h.b16 %v1167
    %v1681 = vunpack.c.l.b16 %v1168
    %v1682 = vunpack.c.h.b16 %v1168
    %v1683 = vunpack.c.l.b16 %v1169
    %v1684 = vunpack.c.l.b16 %v1170
    %v1685 = vunpack.c.h.b16 %v1170
    %v1686 = vunpack.c.l.b16 %v1171
    %v1687 = vunpack.c.h.b16 %v1171
    %v1688 = vunpack.c.l.b16 %v1172
    %v1689 = vunpack.c.l.b16 %v1173
    %v1690 = vunpack.c.h.b16 %v1173
    %v1691 = vunpack.c.l.b16 %v1174
    %v1692 = vunpack.c.h.b16 %v1174
    %v1693 = vunpack.c.l.b16 %v1175
    %v1694 = vunpack.c.l.b16 %v1176
    %v1695 = vunpack.c.h.b16 %v1176
    %v1696 = vunpack.c.l.b16 %v1177
    %v1697 = vunpack.c.h.b16 %v1177
    %v1698 = vunpack.c.l.b16 %v1178
    %v1699 = vunpack.c.l.b16 %v1179
    %v1700 = vunpack.c.h.b16 %v1179
    %v1701 = vunpack.c.l.b16 %v1180
    %v1702 = vunpack.c.h.b16 %v1180
    %v1703 = vunpack.c.l.b16 %v1181
    %v1704 = vunpack.c.l.b16 %v1182
    %v1705 = vunpack.c.h.b16 %v1182
    %v1706 = vunpack.c.l.b16 %v1183
    %v1707 = vunpack.c.h.b16 %v1183
    %v1708 = vunpack.c.l.b16 %v1184
    %v1709 = vunpack.c.l.b16 %v1185
    %v1710 = vunpack.c.h.b16 %v1185
    %v1711 = vunpack.c.l.b16 %v1186
    %v1712 = vunpack.c.h.b16 %v1186
    %v1713 = vunpack.c.l.b16 %v1187
    %v1714 = vunpack.c.l.b16 %v1188
    %v1715 = vunpack.c.h.b16 %v1188
    %v1716 = vunpack.c.l.b16 %v1189
    %v1717 = vunpack.c.h.b16 %v1189
    %v1718 = vunpack.c.l.b16 %v1190
    %v1719 = vunpack.c.l.b16 %v1191
    %v1720 = vunpack.c.h.b16 %v1191
    %v1721 = vunpack.c.l.b16 %v1192
    %v1722 = vunpack.c.h.b16 %v1192
    %v1723 = vunpack.c.l.b16 %v1193
    %v1724 = vunpack.c.l.b16 %v1194
    %v1725 = vunpack.c.h.b16 %v1194
    %v1726 = vunpack.c.l.b16 %v1195
    %v1727 = vunpack.c.h.b16 %v1195
    %v1728 = vunpack.c.l.b16 %v1196
    %v1729 = vunpack.c.l.b16 %v1197
    %v1730 = vunpack.c.h.b16 %v1197
    %v1731 = vunpack.c.l.b16 %v1198
    %v1732 = vunpack.c.h.b16 %v1198
    %v1733 = vunpack.c.l.b16 %v1199
    %v1734 = vunpack.c.l.b16 %v1200
    %v1735 = vunpack.c.h.b16 %v1200
    %v1736 = vunpack.c.l.b16 %v1201
    %v1737 = vunpack.c.h.b16 %v1201
    %v1738 = vunpack.c.l.b16 %v1202
    %v1739 = vunpack.c.l.b16 %v1203
    %v1740 = vunpack.c.h.b16 %v1203
    %v1741 = vunpack.c.l.b16 %v1204
    %v1742 = vunpack.c.h.b16 %v1204
    %v1743 = vunpack.c.l.b16 %v1205
    %v1744 = vunpack.c.l.b16 %v1206
    %v1745 = vunpack.c.h.b16 %v1206
    %v1746 = vunpack.c.l.b16 %v1207
    %v1747 = vunpack.c.h.b16 %v1207
    %v1748 = vunpack.c.l.b16 %v1208
    %v1749 = vunpack.c.l.b16 %v1209
    %v1750 = vunpack.c.h.b16 %v1209
    %v1751 = vunpack.c.l.b16 %v1210
    %v1752 = vunpack.c.h.b16 %v1210
    %v1753 = vunpack.c.l.b16 %v1211
    %v1754 = vunpack.c.l.b16 %v1212
    %v1755 = vunpack.c.h.b16 %v1212
    %v1756 = vunpack.c.l.b16 %v1213
    %v1757 = vunpack.c.h.b16 %v1213
    %v1758 = vunpack.c.l.b16 %v1214
    %v1759 = vunpack.c.l.b16 %v1215
    %v1760 = vunpack.c.h.b16 %v1215
    %v1761 = vunpack.c.l.b16 %v1216
    %v1762 = vunpack.c.h.b16 %v1216
    %v1763 = vunpack.c.l.b16 %v1217
    %v1764 = vunpack.c.l.b16 %v1218
    %v1765 = vunpack.c.h.b16 %v1218
    %v1766 = vunpack.c.l.b16 %v1219
    %v1767 = vunpack.c.h.b16 %v1219
    %v1768 = vunpack.c.l.b16 %v1220
    %v1769 = vunpack.c.l.b16 %v1221
    %v1770 = vunpack.c.h.b16 %v1221
    %v1771 = vunpack.c.l.b16 %v1222
    %v1772 = vunpack.c.h.b16 %v1222
    %v1773 = vunpack.c.l.b16 %v1223
    %v1774 = vunpack.c.l.b16 %v1224
    %v1775 = vunpack.c.h.b16 %v1224
    %v1776 = vunpack.c.l.b16 %v1225
    %v1777 = vunpack.c.h.b16 %v1225
    %v1778 = vunpack.c.l.b16 %v1226
    %v1779 = vunpack.c.l.b16 %v1227
    %v1780 = vunpack.c.h.b16 %v1227
    %v1781 = vunpack.c.l.b16 %v1228
    %v1782 = vunpack.c.h.b16 %v1228
    %v1783 = vunpack.c.l.b16 %v1229
    %v1784 = vunpack.c.l.b16 %v1230
    %v1785 = vunpack.c.h.b16 %v1230
    %v1786 = vunpack.c.l.b16 %v1231
    %v1787 = vunpack.c.h.b16 %v1231
    %v1788 = vunpack.c.l.b16 %v1232
    %v1789 = vunpack.c.l.b16 %v1233
    %v1790 = vunpack.c.h.b16 %v1233
    %v1791 = vunpack.c.l.b16 %v1234
    %v1792 = vunpack.c.h.b16 %v1234
    %v1793 = vunpack.c.l.b16 %v1235
    %v1794 = vunpack.c.l.b16 %v1236
    %v1795 = vunpack.c.h.b16 %v1236
    %v1796 = vunpack.c.l.b16 %v1237
    %v1797 = vunpack.c.h.b16 %v1237
    %v1798 = vunpack.c.l.b16 %v1238
    %v1799 = vunpack.c.l.b16 %v1239
    %v1800 = vunpack.c.h.b16 %v1239
    %v1801 = vunpack.c.l.b16 %v1240
    %v1802 = vunpack.c.h.b16 %v1240
    %v1803 = vunpack.c.l.b16 %v1241
    %v1804 = vunpack.c.l.b16 %v1242
    %v1805 = vunpack.c.h.b16 %v1242
    %v1806 = vunpack.c.l.b16 %v1243
    %v1807 = vunpack.c.h.b16 %v1243
    %v1808 = vunpack.c.l.b16 %v1244
    %v1809 = vunpack.c.l.b16 %v1245
    %v1810 = vunpack.c.h.b16 %v1245
    %v1811 = vunpack.c.l.b16 %v1246
    %v1812 = vunpack.c.h.b16 %v1246
    %v1813 = vunpack.c.l.b16 %v1247
    %v1814 = vunpack.c.l.b16 %v1248
    %v1815 = vunpack.c.h.b16 %v1248
    %v1816 = vunpack.c.l.b16 %v1249
    %v1817 = vunpack.c.h.b16 %v1249
    %v1818 = vunpack.c.l.b16 %v1250
    %v1819 = vunpack.c.l.b16 %v1251
    %v1820 = vunpack.c.h.b16 %v1251
    %v1821 = vunpack.c.l.b16 %v1252
    %v1822 = vunpack.c.h.b16 %v1252
    %v1823 = vunpack.c.l.b16 %v1253
    %v1824 = vunpack.c.l.b16 %v1254
    %v1825 = vunpack.c.h.b16 %v1254
    %v1826 = vunpack.c.l.b16 %v1255
    %v1827 = vunpack.c.h.b16 %v1255
    %v1828 = vunpack.c.l.b16 %v1256
    %v1829 = vunpack.c.l.b16 %v1257
    %v1830 = vunpack.c.h.b16 %v1257
    %v1831 = vunpack.c.l.b16 %v1258
    %v1832 = vunpack.c.h.b16 %v1258
    %v1833 = vunpack.c.l.b16 %v1259
    %v1834 = vunpack.c.l.b16 %v1260
    %v1835 = vunpack.c.h.b16 %v1260
    %v1836 = vunpack.c.l.b16 %v1261
    %v1837 = vunpack.c.h.b16 %v1261
    %v1838 = vunpack.c.l.b16 %v1262
    %v1839 = vunpack.c.l.b16 %v1263
    %v1840 = vunpack.c.h.b16 %v1263
    %v1841 = vunpack.c.l.b16 %v1264
    %v1842 = vunpack.c.h.b16 %v1264
    %v1843 = vunpack.c.l.b16 %v1265
    %v1844 = vunpack.c.l.b16 %v1266
    %v1845 = vunpack.c.h.b16 %v1266
    %v1846 = vunpack.c.l.b16 %v1267
    %v1847 = vunpack.c.h.b16 %v1267
    %v1848 = vunpack.c.l.b16 %v1268
    %v1849 = vunpack.c.l.b16 %v1269
    %v1850 = vunpack.c.h.b16 %v1269
    %v1851 = vunpack.c.l.b16 %v1270
    %v1852 = vunpack.c.h.b16 %v1270
    %v1853 = vunpack.c.l.b16 %v1271
    %v1854 = vunpack.c.l.b16 %v1272
    %v1855 = vunpack.c.h.b16 %v1272
    %v1856 = vunpack.c.l.b16 %v1273
    %v1857 = vunpack.c.h.b16 %v1273
    %v1858 = vunpack.c.l.b16 %v1274
    %v1859 = vunpack.c.l.b16 %v1275
    %v1860 = vunpack.c.h.b16 %v1275
    %v1861 = vunpack.c.l.b16 %v1276
    %v1862 = vunpack.c.h.b16 %v1276
    %v1863 = vunpack.c.l.b16 %v1277
    %v1864 = vunpack.c.l.b16 %v1278
    %v1865 = vunpack.c.h.b16 %v1278
    %v1866 = vunpack.c.l.b16 %v1279
    %v1867 = vunpack.c.h.b16 %v1279
    %v1868 = vunpack.c.l.b16 %v1280
    %v1869 = vunpack.c.l.b16 %v1281
    %v1870 = vunpack.c.h.b16 %v1281
    %v1871 = vunpack.c.l.b16 %v1282
    %v1872 = vunpack.c.h.b16 %v1282
    %v1873 = vunpack.c.l.b16 %v1283
    %v1874 = vunpack.c.l.b16 %v1284
    %v1875 = vunpack.c.h.b16 %v1284
    %v1876 = vunpack.c.l.b16 %v1285
    %v1877 = vunpack.c.h.b16 %v1285
    %v1878 = vunpack.c.l.b16 %v1286
    %v1879 = vunpack.c.l.b16 %v1287
    %v1880 = vunpack.c.h.b16 %v1287
    %v1881 = vunpack.c.l.b16 %v1288
    %v1882 = vunpack.c.h.b16 %v1288
    %v1883 = vunpack.c.l.b16 %v1289
    %v1884 = vunpack.c.l.b16 %v1290
    %v1885 = vunpack.c.h.b16 %v1290
    %v1886 = vunpack.c.l.b16 %v1291
    %v1887 = vunpack.c.h.b16 %v1291
    %v1888 = vunpack.c.l.b16 %v1292
    %v1889 = vunpack.c.l.b16 %v1293
    %v1890 = vunpack.c.h.b16 %v1293
    %v1891 = vunpack.c.l.b16 %v1294
    %v1892 = vunpack.c.h.b16 %v1294
    %v1893 = vunpack.c.l.b16 %v1295
    %v1894 = vunpack.c.l.b16 %v1296
    %v1895 = vunpack.c.h.b16 %v1296
    %v1896 = vunpack.c.l.b16 %v1297
    %v1897 = vunpack.c.h.b16 %v1297
    %v1898 = vunpack.c.l.b16 %v1298
    %v1899 = vunpack.c.l.b16 %v1299
    %v1900 = vunpack.c.h.b16 %v1299
    %v1901 = vunpack.c.l.b16 %v1300
    %v1902 = vunpack.c.h.b16 %v1300
    %v1903 = vunpack.c.l.b16 %v1301
    %v1904 = vpack.c.b16 %v1549, %v1544
    %v1905 = vpack.c.b16 %v1550, %v1545
    %v1906 = vpack.c.b16 %v1551, %v1546
    %v1907 = vpack.c.b16 %v1552, %v1547
    %v1908 = vpack.c.b16 %v1553, %v1548
    %v1909 = vpack.c.b16 %v1559, %v1554
    %v1910 = vpack.c.b16 %v1560, %v1555
    %v1911 = vpack.c.b16 %v1561, %v1556
    %v1912 = vpack.c.b16 %v1562, %v1557
    %v1913 = vpack.c.b16 %v1563, %v1558
    %v1914 = vpack.c.b16 %v1569, %v1564
    %v1915 = vpack.c.b16 %v1570, %v1565
    %v1916 = vpack.c.b16 %v1571, %v1566
    %v1917 = vpack.c.b16 %v1572, %v1567
    %v1918 = vpack.c.b16 %v1573, %v1568
    %v1919 = vpack.c.b16 %v1579, %v1574
    %v1920 = vpack.c.b16 %v1580, %v1575
    %v1921 = vpack.c.b16 %v1581, %v1576
    %v1922 = vpack.c.b16 %v1582, %v1577
    %v1923 = vpack.c.b16 %v1583, %v1578
    %v1924 = vpack.c.b16 %v1589, %v1584
    %v1925 = vpack.c.b16 %v1590, %v1585
    %v1926 = vpack.c.b16 %v1591, %v1586
    %v1927 = vpack.c.b16 %v1592, %v1587
    %v1928 = vpack.c.b16 %v1593, %v1588
    %v1929 = vpack.c.b16 %v1599, %v1594
    %v1930 = vpack.c.b16 %v1600, %v1595
    %v1931 = vpack.c.b16 %v1601, %v1596
    %v1932 = vpack.c.b16 %v1602, %v1597
    %v1933 = vpack.c.b16 %v1603, %v1598
    %v1934 = vpack.c.b16 %v1609, %v1604
    %v1935 = vpack.c.b16 %v1610, %v1605
    %v1936 = vpack.c.b16 %v1611, %v1606
    %v1937 = vpack.c.b16 %v1612, %v1607
    %v1938 = vpack.c.b16 %v1613, %v1608
    %v1939 = vpack.c.b16 %v1619, %v1614
    %v1940 = vpack.c.b16 %v1620, %v1615
    %v1941 = vpack.c.b16 %v1621, %v1616
    %v1942 = vpack.c.b16 %v1622, %v1617
    %v1943 = vpack.c.b16 %v1623, %v1618
    %v1944 = vpack.c.b16 %v1629, %v1624
    %v1945 = vpack.c.b16 %v1630, %v1625
    %v1946 = vpack.c.b16 %v1631, %v1626
    %v1947 = vpack.c.b16 %v1632, %v1627
    %v1948 = vpack.c.b16 %v1633, %v1628
    %v1949 = vpack.c.b16 %v1639, %v1634
    %v1950 = vpack.c.b16 %v1640, %v1635
    %v1951 = vpack.c.b16 %v1641, %v1636
    %v1952 = vpack.c.b16 %v1642, %v1637
    %v1953 = vpack.c.b16 %v1643, %v1638
    %v1954 = vpack.c.b16 %v1649, %v1644
    %v1955 = vpack.c.b16 %v1650, %v1645
    %v1956 = vpack.c.b16 %v1651, %v1646
    %v1957 = vpack.c.b16 %v1652, %v1647
    %v1958 = vpack.c.b16 %v1653, %v1648
    %v1959 = vpack.c.b16 %v1659, %v1654
    %v1960 = vpack.c.b16 %v1660, %v1655
    %v1961 = vpack.c.b16 %v1661, %v1656
    %v1962 = vpack.c.b16 %v1662, %v1657
    %v1963 = vpack.c.b16 %v1663, %v1658
    %v1964 = vpack.c.b16 %v1669, %v1664
    %v1965 = vpack.c.b16 %v1670, %v1665
    %v1966 = vpack.c.b16 %v1671, %v1666
    %v1967 = vpack.c.b16 %v1672, %v1667
    %v1968 = vpack.c.b16 %v1673, %v1668
    %v1969 = vpack.c.b16 %v1679, %v1674
    %v1970 = vpack.c.b16 %v1680, %v1675
    %v1971 = vpack.c.b16 %v1681, %v1676
    %v1972 = vpack.c.b16 %v1682, %v1677
    %v1973 = vpack.c.b16 %v1683, %v1678
    %v1974 = vpack.c.b16 %v1689, %v1684
    %v1975 = vpack.c.b16 %v1690, %v1685
    %v1976 = vpack.c.b16 %v1691, %v1686
    %v1977 = vpack.c.b16 %v1692, %v1687
    %v1978 = vpack.c.b16 %v1693, %v1688
    %v1979 = vpack.c.b16 %v1699, %v1694
    %v1980 = vpack.c.b16 %v1700, %v1695
    %v1981 = vpack.c.b16 %v1701, %v1696
    %v1982 = vpack.c.b16 %v1702, %v1697
    %v1983 = vpack.c.b16 %v1703, %v1698
    %v1984 = vpack.c.b16 %v1709, %v1704
    %v1985 = vpack.c.b16 %v1710, %v1705
    %v1986 = vpack.c.b16 %v1711, %v1706
    %v1987 = vpack.c.b16 %v1712, %v1707
    %v1988 = vpack.c.b16 %v1713, %v1708
    %v1989 = vpack.c.b16 %v1719, %v1714
    %v1990 = vpack.c.b16 %v1720, %v1715
    %v1991 = vpack.c.b16 %v1721, %v1716
    %v1992 = vpack.c.b16 %v1722, %v1717
    %v1993 = vpack.c.b16 %v1723, %v1718
    %v1994 = vpack.c.b16 %v1729, %v1724
    %v1995 = vpack.c.b16 %v1730, %v1725
    %v1996 = vpack.c.b16 %v1731, %v1726
    %v1997 = vpack.c.b16 %v1732, %v1727
    %v1998 = vpack.c.b16 %v1733, %v1728
    %v1999 = vpack.c.b16 %v1739, %v1734
    %v2000 = vpack.c.b16 %v1740, %v1735
    %v2001 = vpack.c.b16 %v1741, %v1736
    %v2002 = vpack.c.b16 %v1742, %v1737
    %v2003 = vpack.c.b16 %v1743, %v1738
    %v2004 = vpack.c.b16 %v1749, %v1744
    %v2005 = vpack.c.b16 %v1750, %v1745
    %v2006 = vpack.c.b16 %v1751, %v1746
    %v2007 = vpack.c.b16 %v1752, %v1747
    %v2008 = vpack.c.b16 %v1753, %v1748
    %v2009 = vpack.c.b16 %v1759, %v1754
    %v2010 = vpack.c.b16 %v1760, %v1755
    %v2011 = vpack.c.b16 %v1761, %v1756
    %v2012 = vpack.c.b16 %v1762, %v1757
    %v2013 = vpack.c.b16 %v1763, %v1758
    %v2014 = vpack.c.b16 %v1769, %v1764
    %v2015 = vpack.c.b16 %v1770, %v1765
    %v2016 = vpack.c.b16 %v1771, %v1766
    %v2017 = vpack.c.b16 %v1772, %v1767
    %v2018 = vpack.c.b16 %v1773, %v1768
    %v2019 = vpack.c.b16 %v1779, %v1774
    %v2020 = vpack.c.b16 %v1780, %v1775
    %v2021 = vpack.c.b16 %v1781, %v1776
    %v2022 = vpack.c.b16 %v1782, %v1777
    %v2023 = vpack.c.b16 %v1783, %v1778
    %v2024 = vpack.c.b16 %v1789, %v1784
    %v2025 = vpack.c.b16 %v1790, %v1785
    %v2026 = vpack.c.b16 %v1791, %v1786
    %v2027 = vpack.c.b16 %v1792, %v1787
    %v2028 = vpack.c.b16 %v1793, %v1788
    %v2029 = vpack.c.b16 %v1799, %v1794
    %v2030 = vpack.c.b16 %v1800, %v1795
    %v2031 = vpack.c.b16 %v1801, %v1796
    %v2032 = vpack.c.b16 %v1802, %v1797
    %v2033 = vpack.c.b16 %v1803, %v1798
    %v2034 = vpack.c.b16 %v1809, %v1804
    %v2035 = vpack.c.b16 %v1810, %v1805
    %v2036 = vpack.c.b16 %v1811, %v1806
    %v2037 = vpack.c.b16 %v1812, %v1807
    %v2038 = vpack.c.b16 %v1813, %v1808
    %v2039 = vpack.c.b16 %v1819, %v1814
    %v2040 = vpack.c.b16 %v1820, %v1815
    %v2041 = vpack.c.b16 %v1821, %v1816
    %v2042 = vpack.c.b16 %v1822, %v1817
    %v2043 = vpack.c.b16 %v1823, %v1818
    %v2044 = vpack.c.b16 %v1829, %v1824
    %v2045 = vpack.c.b16 %v1830, %v1825
    %v2046 = vpack.c.b16 %v1831, %v1826
    %v2047 = vpack.c.b16 %v1832, %v1827
    %v2048 = vpack.c.b16 %v1833, %v1828
    %v2049 = vpack.c.b16 %v1839, %v1834
    %v2050 = vpack.c.b16 %v1840, %v1835
    %v2051 = vpack.c.b16 %v1841, %v1836
    %v2052 = vpack.c.b16 %v1842, %v1837
    %v2053 = vpack.c.b16 %v1843, %v1838
    %v2054 = vpack.c.b16 %v1849, %v1844
    %v2055 = vpack.c.b16 %v1850, %v1845
    %v2056 = vpack.c.b16 %v1851, %v1846
    %v2057 = vpack.c.b16 %v1852, %v1847
    %v2058 = vpack.c.b16 %v1853, %v1848
    %v2059 = vpack.c.b16 %v1859, %v1854
    %v2060 = vpack.c.b16 %v1860, %v1855
    %v2061 = vpack.c.b16 %v1861, %v1856
    %v2062 = vpack.c.b16 %v1862, %v1857
    %v2063 = vpack.c.b16 %v1863, %v1858
    %v2064 = vpack.c.b16 %v1869, %v1864
    %v2065 = vpack.c.b16 %v1870, %v1865
    %v2066 = vpack.c.b16 %v1871, %v1866
    %v2067 = vpack.c.b16 %v1872, %v1867
    %v2068 = vpack.c.b16 %v1873, %v1868
    %v2069 = vpack.c.b16 %v1879, %v1874
    %v2070 = vpack.c.b16 %v1880, %v1875
    %v2071 = vpack.c.b16 %v1881, %v1876
    %v2072 = vpack.c.b16 %v1882, %v1877
    %v2073 = vpack.c.b16 %v1883, %v1878
    %v2074 = vpack.c.b16 %v1889, %v1884
    %v2075 = vpack.c.b16 %v1890, %v1885
    %v2076 = vpack.c.b16 %v1891, %v1886
    %v2077 = vpack.c.b16 %v1892, %v1887
    %v2078 = vpack.c.b16 %v1893, %v1888
    %v2079 = vpack.c.b16 %v1899, %v1894
    %v2080 = vpack.c.b16 %v1900, %v1895
    %v2081 = vpack.c.b16 %v1901, %v1896
    %v2082 = vpack.c.b16 %v1902, %v1897
    %v2083 = vpack.c.b16 %v1903, %v1898
    %vm2264 = vcmask 523264
    %v2266 = vsel %vm2264, %v1083, 0
    %2268 = vmatprep.subr.bf16.mxu0 %v1905
    %2269 = vmatpush1.bf16.msra.mxu0 %v1904
    %2270 = vmatprep.subr.bf16.mxu0 %v1910
    %2271 = vmatpush1.bf16.msra.mxu0 %v1909
    %2272 = vmatprep.subr.bf16.mxu0 %v1915
    %2273 = vmatpush1.bf16.msra.mxu0 %v1914
    %2274 = vmatprep.subr.bf16.mxu0 %v1920
    %2275 = vmatpush1.bf16.msra.mxu0 %v1919
    %2276 = vmatprep.subr.bf16.mxu0 %v1925
    %2277 = vmatpush1.bf16.msra.mxu0 %v1924
    %2278 = vmatprep.subr.bf16.mxu0 %v1930
    %2279 = vmatpush1.bf16.msra.mxu0 %v1929
    %2280 = vmatprep.subr.bf16.mxu0 %v1935
    %2281 = vmatpush1.bf16.msra.mxu0 %v1934
    %2282 = vmatprep.subr.bf16.mxu0 %v1940
    %2283 = vmatpush1.bf16.msra.mxu0 %v1939
    %2284 = vmatprep.subr.bf16.mxu0 %v1945
    %2285 = vmatpush1.bf16.msra.mxu0 %v1944
    %2286 = vmatprep.subr.bf16.mxu0 %v1950
    %2287 = vmatpush1.bf16.msra.mxu0 %v1949
    %2288 = vmatprep.subr.bf16.mxu0 %v1955
    %2289 = vmatpush1.bf16.msra.mxu0 %v1954
    %2290 = vmatprep.subr.bf16.mxu0 %v1960
    %2291 = vmatpush1.bf16.msra.mxu0 %v1959
    %2292 = vmatprep.subr.bf16.mxu0 %v1965
    %2293 = vmatpush1.bf16.msra.mxu0 %v1964
    %2294 = vmatprep.subr.bf16.mxu0 %v1970
    %2295 = vmatpush1.bf16.msra.mxu0 %v1969
    %2296 = vmatprep.subr.bf16.mxu0 %v1975
    %2297 = vmatpush1.bf16.msra.mxu0 %v1974
    %2298 = vmatprep.subr.bf16.mxu0 %v1980
    %2299 = vmatpush1.bf16.msra.mxu0 %v1979
    %2300 = vmatprep.mubr.bf16.mxu0 %v1080
    %2301 = vmatmul.mubr.bf16.gmra.mrb[0].mxu0 %v1079
    %v2302 = vpop.f32.mrb[0].mxu0
    %v2303 = vadd.f32 %v1306, %v2302
    %v2304 = vpop.f32.mrb[0].mxu0
    %v2305 = vadd.f32 %v1310, %v2304
    %v2306 = vpop.f32.mrb[0].mxu0
    %v2307 = vpop.f32.mrb[0].mxu0
    %2308 = vdwg.mxu0
    %2309 = vmatprep.subr.bf16.mxu0 %v1985
    %2310 = vmatpush1.bf16.msra.mxu0 %v1984
    %2311 = vmatprep.subr.bf16.mxu0 %v1990
    %2312 = vmatpush1.bf16.msra.mxu0 %v1989
    %2313 = vmatprep.subr.bf16.mxu0 %v1995
    %2314 = vmatpush1.bf16.msra.mxu0 %v1994
    %2315 = vmatprep.subr.bf16.mxu0 %v2000
    %2316 = vmatpush1.bf16.msra.mxu0 %v1999
    %2317 = vmatprep.subr.bf16.mxu0 %v2005
    %2318 = vmatpush1.bf16.msra.mxu0 %v2004
    %2319 = vmatprep.subr.bf16.mxu0 %v2010
    %2320 = vmatpush1.bf16.msra.mxu0 %v2009
    %2321 = vmatprep.subr.bf16.mxu0 %v2015
    %2322 = vmatpush1.bf16.msra.mxu0 %v2014
    %2323 = vmatprep.subr.bf16.mxu0 %v2020
    %2324 = vmatpush1.bf16.msra.mxu0 %v2019
    %2325 = vmatprep.subr.bf16.mxu0 %v2025
    %2326 = vmatpush1.bf16.msra.mxu0 %v2024
    %2327 = vmatprep.subr.bf16.mxu0 %v2030
    %2328 = vmatpush1.bf16.msra.mxu0 %v2029
    %2329 = vmatprep.subr.bf16.mxu0 %v2035
    %2330 = vmatpush1.bf16.msra.mxu0 %v2034
    %2331 = vmatprep.subr.bf16.mxu0 %v2040
    %2332 = vmatpush1.bf16.msra.mxu0 %v2039
    %2333 = vmatprep.subr.bf16.mxu0 %v2045
    %2334 = vmatpush1.bf16.msra.mxu0 %v2044
    %2335 = vmatprep.subr.bf16.mxu0 %v2050
    %2336 = vmatpush1.bf16.msra.mxu0 %v2049
    %2337 = vmatprep.subr.bf16.mxu0 %v2055
    %2338 = vmatpush1.bf16.msra.mxu0 %v2054
    %2339 = vmatprep.subr.bf16.mxu0 %v2060
    %2340 = vmatpush1.bf16.msra.mxu0 %v2059
    %2341 = vmatprep.mubr.bf16.mxu0 %v1082
    %2342 = vmatmul.mubr.bf16.gmra.mrb[0].mxu0 %v1081
    %v2343 = vpop.f32.mrb[0].mxu0
    %v2344 = vadd.f32 %v2303, %v2343
    %v2345 = vpop.f32.mrb[0].mxu0
    %v2346 = vadd.f32 %v2305, %v2345
    %v2347 = vpop.f32.mrb[0].mxu0
    %v2348 = vpop.f32.mrb[0].mxu0
    %2349 = vdwg.mxu0
    %2350 = vmatprep.subr.bf16.mxu0 %v2065
    %2351 = vmatpush1.bf16.msra.mxu0 %v2064
    %2352 = vmatprep.subr.bf16.mxu0 %v2070
    %2353 = vmatpush1.bf16.msra.mxu0 %v2069
    %2354 = vmatprep.subr.bf16.mxu0 %v2075
    %2355 = vmatpush1.bf16.msra.mxu0 %v2074
    %2356 = vmatprep.subr.bf16.mxu0 %v2080
    %2357 = vmatpush1.bf16.msra.mxu0 %v2079
    %2358 = vmatprep.subr.bf16.mxu0 0
    %2359 = vmatpush1.bf16.msra.mxu0 0
    %2360 = vmatprep.subr.bf16.mxu0 0
    %2361 = vmatpush1.bf16.msra.mxu0 0
    %2362 = vmatprep.subr.bf16.mxu0 0
    %2363 = vmatpush1.bf16.msra.mxu0 0
    %2364 = vmatprep.subr.bf16.mxu0 0
    %2365 = vmatpush1.bf16.msra.mxu0 0
    %2366 = vmatprep.subr.bf16.mxu0 0
    %2367 = vmatpush1.bf16.msra.mxu0 0
    %2368 = vmatprep.subr.bf16.mxu0 0
    %2369 = vmatpush1.bf16.msra.mxu0 0
    %2370 = vmatprep.subr.bf16.mxu0 0
    %2371 = vmatpush1.bf16.msra.mxu0 0
    %2372 = vmatprep.subr.bf16.mxu0 0
    %2373 = vmatpush1.bf16.msra.mxu0 0
    %2374 = vmatprep.subr.bf16.mxu0 0
    %2375 = vmatpush1.bf16.msra.mxu0 0
    %2376 = vmatprep.subr.bf16.mxu0 0
    %2377 = vmatpush1.bf16.msra.mxu0 0
    %2378 = vmatprep.subr.bf16.mxu0 0
    %2379 = vmatpush1.bf16.msra.mxu0 0
    %2380 = vmatprep.subr.bf16.mxu0 0
    %2381 = vmatpush1.bf16.msra.mxu0 0
    %2382 = vmatprep.mubr.bf16.mxu0 0
    %2383 = vmatmul.mubr.bf16.gmra.mrb[0].mxu0 %v2266
    %v2384 = vpop.f32.mrb[0].mxu0
    %v2385 = vadd.f32 %v2344, %v2384
    %v2386 = vpop.f32.mrb[0].mxu0
    %v2387 = vadd.f32 %v2346, %v2386
    %v2388 = vpop.f32.mrb[0].mxu0
    %v2389 = vpop.f32.mrb[0].mxu0
    %2390 = vdwg.mxu0
    %2391 = vmatprep.subr.bf16.mxu0 %v1907
    %2392 = vmatpush1.bf16.msra.mxu0 %v1906
    %2393 = vmatprep.subr.bf16.mxu0 %v1912
    %2394 = vmatpush1.bf16.msra.mxu0 %v1911
    %2395 = vmatprep.subr.bf16.mxu0 %v1917
    %2396 = vmatpush1.bf16.msra.mxu0 %v1916
    %2397 = vmatprep.subr.bf16.mxu0 %v1922
    %2398 = vmatpush1.bf16.msra.mxu0 %v1921
    %2399 = vmatprep.subr.bf16.mxu0 %v1927
    %2400 = vmatpush1.bf16.msra.mxu0 %v1926
    %2401 = vmatprep.subr.bf16.mxu0 %v1932
    %2402 = vmatpush1.bf16.msra.mxu0 %v1931
    %2403 = vmatprep.subr.bf16.mxu0 %v1937
    %2404 = vmatpush1.bf16.msra.mxu0 %v1936
    %2405 = vmatprep.subr.bf16.mxu0 %v1942
    %2406 = vmatpush1.bf16.msra.mxu0 %v1941
    %2407 = vmatprep.subr.bf16.mxu0 %v1947
    %2408 = vmatpush1.bf16.msra.mxu0 %v1946
    %2409 = vmatprep.subr.bf16.mxu0 %v1952
    %2410 = vmatpush1.bf16.msra.mxu0 %v1951
    %2411 = vmatprep.subr.bf16.mxu0 %v1957
    %2412 = vmatpush1.bf16.msra.mxu0 %v1956
    %2413 = vmatprep.subr.bf16.mxu0 %v1962
    %2414 = vmatpush1.bf16.msra.mxu0 %v1961
    %2415 = vmatprep.subr.bf16.mxu0 %v1967
    %2416 = vmatpush1.bf16.msra.mxu0 %v1966
    %2417 = vmatprep.subr.bf16.mxu0 %v1972
    %2418 = vmatpush1.bf16.msra.mxu0 %v1971
    %2419 = vmatprep.subr.bf16.mxu0 %v1977
    %2420 = vmatpush1.bf16.msra.mxu0 %v1976
    %2421 = vmatprep.subr.bf16.mxu0 %v1982
    %2422 = vmatpush1.bf16.msra.mxu0 %v1981
    %2423 = vmatprep.mubr.bf16.mxu0 %v1080
    %2424 = vmatmul.mubr.bf16.gmra.mrb[0].mxu0 %v1079
    %v2425 = vpop.f32.mrb[0].mxu0
    %v2426 = vadd.f32 %v1314, %v2425
    %v2427 = vpop.f32.mrb[0].mxu0
    %v2428 = vadd.f32 %v1318, %v2427
    %v2429 = vpop.f32.mrb[0].mxu0
    %v2430 = vpop.f32.mrb[0].mxu0
    %2431 = vdwg.mxu0
    %2432 = vmatprep.subr.bf16.mxu0 %v1987
    %2433 = vmatpush1.bf16.msra.mxu0 %v1986
    %2434 = vmatprep.subr.bf16.mxu0 %v1992
    %2435 = vmatpush1.bf16.msra.mxu0 %v1991
    %2436 = vmatprep.subr.bf16.mxu0 %v1997
    %2437 = vmatpush1.bf16.msra.mxu0 %v1996
    %2438 = vmatprep.subr.bf16.mxu0 %v2002
    %2439 = vmatpush1.bf16.msra.mxu0 %v2001
    %2440 = vmatprep.subr.bf16.mxu0 %v2007
    %2441 = vmatpush1.bf16.msra.mxu0 %v2006
    %2442 = vmatprep.subr.bf16.mxu0 %v2012
    %2443 = vmatpush1.bf16.msra.mxu0 %v2011
    %2444 = vmatprep.subr.bf16.mxu0 %v2017
    %2445 = vmatpush1.bf16.msra.mxu0 %v2016
    %2446 = vmatprep.subr.bf16.mxu0 %v2022
    %2447 = vmatpush1.bf16.msra.mxu0 %v2021
    %2448 = vmatprep.subr.bf16.mxu0 %v2027
    %2449 = vmatpush1.bf16.msra.mxu0 %v2026
    %2450 = vmatprep.subr.bf16.mxu0 %v2032
    %2451 = vmatpush1.bf16.msra.mxu0 %v2031
    %2452 = vmatprep.subr.bf16.mxu0 %v2037
    %2453 = vmatpush1.bf16.msra.mxu0 %v2036
    %2454 = vmatprep.subr.bf16.mxu0 %v2042
    %2455 = vmatpush1.bf16.msra.mxu0 %v2041
    %2456 = vmatprep.subr.bf16.mxu0 %v2047
    %2457 = vmatpush1.bf16.msra.mxu0 %v2046
    %2458 = vmatprep.subr.bf16.mxu0 %v2052
    %2459 = vmatpush1.bf16.msra.mxu0 %v2051
    %2460 = vmatprep.subr.bf16.mxu0 %v2057
    %2461 = vmatpush1.bf16.msra.mxu0 %v2056
    %2462 = vmatprep.subr.bf16.mxu0 %v2062
    %2463 = vmatpush1.bf16.msra.mxu0 %v2061
    %2464 = vmatprep.mubr.bf16.mxu0 %v1082
    %2465 = vmatmul.mubr.bf16.gmra.mrb[0].mxu0 %v1081
    %v2466 = vpop.f32.mrb[0].mxu0
    %v2467 = vadd.f32 %v2426, %v2466
    %v2468 = vpop.f32.mrb[0].mxu0
    %v2469 = vadd.f32 %v2428, %v2468
    %v2470 = vpop.f32.mrb[0].mxu0
    %v2471 = vpop.f32.mrb[0].mxu0
    %2472 = vdwg.mxu0
    %2473 = vmatprep.subr.bf16.mxu0 %v2067
    %2474 = vmatpush1.bf16.msra.mxu0 %v2066
    %2475 = vmatprep.subr.bf16.mxu0 %v2072
    %2476 = vmatpush1.bf16.msra.mxu0 %v2071
    %2477 = vmatprep.subr.bf16.mxu0 %v2077
    %2478 = vmatpush1.bf16.msra.mxu0 %v2076
    %2479 = vmatprep.subr.bf16.mxu0 %v2082
    %2480 = vmatpush1.bf16.msra.mxu0 %v2081
    %2481 = vmatprep.subr.bf16.mxu0 0
    %2482 = vmatpush1.bf16.msra.mxu0 0
    %2483 = vmatprep.subr.bf16.mxu0 0
    %2484 = vmatpush1.bf16.msra.mxu0 0
    %2485 = vmatprep.subr.bf16.mxu0 0
    %2486 = vmatpush1.bf16.msra.mxu0 0
    %2487 = vmatprep.subr.bf16.mxu0 0
    %2488 = vmatpush1.bf16.msra.mxu0 0
    %2489 = vmatprep.subr.bf16.mxu0 0
    %2490 = vmatpush1.bf16.msra.mxu0 0
    %2491 = vmatprep.subr.bf16.mxu0 0
    %2492 = vmatpush1.bf16.msra.mxu0 0
    %2493 = vmatprep.subr.bf16.mxu0 0
    %2494 = vmatpush1.bf16.msra.mxu0 0
    %2495 = vmatprep.subr.bf16.mxu0 0
    %2496 = vmatpush1.bf16.msra.mxu0 0
    %2497 = vmatprep.subr.bf16.mxu0 0
    %2498 = vmatpush1.bf16.msra.mxu0 0
    %2499 = vmatprep.subr.bf16.mxu0 0
    %2500 = vmatpush1.bf16.msra.mxu0 0
    %2501 = vmatprep.subr.bf16.mxu0 0
    %2502 = vmatpush1.bf16.msra.mxu0 0
    %2503 = vmatprep.subr.bf16.mxu0 0
    %2504 = vmatpush1.bf16.msra.mxu0 0
    %2505 = vmatprep.mubr.bf16.mxu0 0
    %2506 = vmatmul.mubr.bf16.gmra.mrb[0].mxu0 %v2266
    %v2507 = vpop.f32.mrb[0].mxu0
    %v2508 = vadd.f32 %v2467, %v2507
    %v2509 = vpop.f32.mrb[0].mxu0
    %v2510 = vadd.f32 %v2469, %v2509
    %v2511 = vpop.f32.mrb[0].mxu0
    %v2512 = vpop.f32.mrb[0].mxu0
    %2513 = vdwg.mxu0
    %2514 = vmatprep.subr.bf16.mxu0 0
    %2515 = vmatpush1.bf16.msra.mxu0 %v1908
    %2516 = vmatprep.subr.bf16.mxu0 0
    %2517 = vmatpush1.bf16.msra.mxu0 %v1913
    %2518 = vmatprep.subr.bf16.mxu0 0
    %2519 = vmatpush1.bf16.msra.mxu0 %v1918
    %2520 = vmatprep.subr.bf16.mxu0 0
    %2521 = vmatpush1.bf16.msra.mxu0 %v1923
    %2522 = vmatprep.subr.bf16.mxu0 0
    %2523 = vmatpush1.bf16.msra.mxu0 %v1928
    %2524 = vmatprep.subr.bf16.mxu0 0
    %2525 = vmatpush1.bf16.msra.mxu0 %v1933
    %2526 = vmatprep.subr.bf16.mxu0 0
    %2527 = vmatpush1.bf16.msra.mxu0 %v1938
    %2528 = vmatprep.subr.bf16.mxu0 0
    %2529 = vmatpush1.bf16.msra.mxu0 %v1943
    %2530 = vmatprep.subr.bf16.mxu0 0
    %2531 = vmatpush1.bf16.msra.mxu0 %v1948
    %2532 = vmatprep.subr.bf16.mxu0 0
    %2533 = vmatpush1.bf16.msra.mxu0 %v1953
    %2534 = vmatprep.subr.bf16.mxu0 0
    %2535 = vmatpush1.bf16.msra.mxu0 %v1958
    %2536 = vmatprep.subr.bf16.mxu0 0
    %2537 = vmatpush1.bf16.msra.mxu0 %v1963
    %2538 = vmatprep.subr.bf16.mxu0 0
    %2539 = vmatpush1.bf16.msra.mxu0 %v1968
    %2540 = vmatprep.subr.bf16.mxu0 0
    %2541 = vmatpush1.bf16.msra.mxu0 %v1973
    %2542 = vmatprep.subr.bf16.mxu0 0
    %2543 = vmatpush1.bf16.msra.mxu0 %v1978
    %2544 = vmatprep.subr.bf16.mxu0 0
    %2545 = vmatpush1.bf16.msra.mxu0 %v1983
    %2546 = vmatprep.mubr.bf16.mxu0 %v1080
    %2547 = vmatmul.mubr.bf16.gmra.mrb[0].mxu0 %v1079
    %v2548 = vpop.f32.mrb[0].mxu0
    %v2549 = vadd.f32 %v1322, %v2548
    %v2550 = vpop.f32.mrb[0].mxu0
    %v2551 = vpop.f32.mrb[0].mxu0
    %v2552 = vpop.f32.mrb[0].mxu0
    %2553 = vdwg.mxu0
    %2554 = vmatprep.subr.bf16.mxu0 0
    %2555 = vmatpush1.bf16.msra.mxu0 %v1988
    %2556 = vmatprep.subr.bf16.mxu0 0
    %2557 = vmatpush1.bf16.msra.mxu0 %v1993
    %2558 = vmatprep.subr.bf16.mxu0 0
    %2559 = vmatpush1.bf16.msra.mxu0 %v1998
    %2560 = vmatprep.subr.bf16.mxu0 0
    %2561 = vmatpush1.bf16.msra.mxu0 %v2003
    %2562 = vmatprep.subr.bf16.mxu0 0
    %2563 = vmatpush1.bf16.msra.mxu0 %v2008
    %2564 = vmatprep.subr.bf16.mxu0 0
    %2565 = vmatpush1.bf16.msra.mxu0 %v2013
    %2566 = vmatprep.subr.bf16.mxu0 0
    %2567 = vmatpush1.bf16.msra.mxu0 %v2018
    %2568 = vmatprep.subr.bf16.mxu0 0
    %2569 = vmatpush1.bf16.msra.mxu0 %v2023
    %2570 = vmatprep.subr.bf16.mxu0 0
    %2571 = vmatpush1.bf16.msra.mxu0 %v2028
    %2572 = vmatprep.subr.bf16.mxu0 0
    %2573 = vmatpush1.bf16.msra.mxu0 %v2033
    %2574 = vmatprep.subr.bf16.mxu0 0
    %2575 = vmatpush1.bf16.msra.mxu0 %v2038
    %2576 = vmatprep.subr.bf16.mxu0 0
    %2577 = vmatpush1.bf16.msra.mxu0 %v2043
    %2578 = vmatprep.subr.bf16.mxu0 0
    %2579 = vmatpush1.bf16.msra.mxu0 %v2048
    %2580 = vmatprep.subr.bf16.mxu0 0
    %2581 = vmatpush1.bf16.msra.mxu0 %v2053
    %2582 = vmatprep.subr.bf16.mxu0 0
    %2583 = vmatpush1.bf16.msra.mxu0 %v2058
    %2584 = vmatprep.subr.bf16.mxu0 0
    %2585 = vmatpush1.bf16.msra.mxu0 %v2063
    %2586 = vmatprep.mubr.bf16.mxu0 %v1082
    %2587 = vmatmul.mubr.bf16.gmra.mrb[0].mxu0 %v1081
    %v2588 = vpop.f32.mrb[0].mxu0
    %v2589 = vadd.f32 %v2549, %v2588
    %v2590 = vpop.f32.mrb[0].mxu0
    %v2591 = vpop.f32.mrb[0].mxu0
    %v2592 = vpop.f32.mrb[0].mxu0
    %2593 = vdwg.mxu0
    %2594 = vmatprep.subr.bf16.mxu0 0
    %2595 = vmatpush1.bf16.msra.mxu0 %v2068
    %2596 = vmatprep.subr.bf16.mxu0 0
    %2597 = vmatpush1.bf16.msra.mxu0 %v2073
    %2598 = vmatprep.subr.bf16.mxu0 0
    %2599 = vmatpush1.bf16.msra.mxu0 %v2078
    %2600 = vmatprep.subr.bf16.mxu0 0
    %2601 = vmatpush1.bf16.msra.mxu0 %v2083
    %2602 = vmatprep.subr.bf16.mxu0 0
    %2603 = vmatpush1.bf16.msra.mxu0 0
    %2604 = vmatprep.subr.bf16.mxu0 0
    %2605 = vmatpush1.bf16.msra.mxu0 0
    %2606 = vmatprep.subr.bf16.mxu0 0
    %2607 = vmatpush1.bf16.msra.mxu0 0
    %2608 = vmatprep.subr.bf16.mxu0 0
    %2609 = vmatpush1.bf16.msra.mxu0 0
    %2610 = vmatprep.subr.bf16.mxu0 0
    %2611 = vmatpush1.bf16.msra.mxu0 0
    %2612 = vmatprep.subr.bf16.mxu0 0
    %2613 = vmatpush1.bf16.msra.mxu0 0
    %2614 = vmatprep.subr.bf16.mxu0 0
    %2615 = vmatpush1.bf16.msra.mxu0 0
    %2616 = vmatprep.subr.bf16.mxu0 0
    %2617 = vmatpush1.bf16.msra.mxu0 0
    %2618 = vmatprep.subr.bf16.mxu0 0
    %2619 = vmatpush1.bf16.msra.mxu0 0
    %2620 = vmatprep.subr.bf16.mxu0 0
    %2621 = vmatpush1.bf16.msra.mxu0 0
    %2622 = vmatprep.subr.bf16.mxu0 0
    %2623 = vmatpush1.bf16.msra.mxu0 0
    %2624 = vmatprep.subr.bf16.mxu0 0
    %2625 = vmatpush1.bf16.msra.mxu0 0
    %2626 = vmatprep.mubr.bf16.mxu0 0
    %2627 = vmatmul.mubr.bf16.gmra.mrb[0].mxu0 %v2266
    %v2628 = vpop.f32.mrb[0].mxu0
    %v2629 = vadd.f32 %v2589, %v2628
    %v2630 = vpop.f32.mrb[0].mxu0
    %v2631 = vpop.f32.mrb[0].mxu0
    %v2632 = vpop.f32.mrb[0].mxu0
    %2633 = vdwg.mxu0
    %vm2634 = vcmp.gt.f32.partialorder %v2385, 0.0
    %vm2635 = vcmp.gt.f32.partialorder %v2387, 0.0
    %vm2636 = vcmp.gt.f32.partialorder %v2508, 0.0
    %vm2637 = vcmp.gt.f32.partialorder %v2510, 0.0
    %vm2638 = vcmp.gt.f32.partialorder %v2629, 0.0
    %v2639 = vmul.f32 %v2385, 0.2
    %v2640 = vmul.f32 %v2387, 0.2
    %v2641 = vmul.f32 %v2508, 0.2
    %v2642 = vmul.f32 %v2510, 0.2
    %v2643 = vmul.f32 %v2629, 0.2
    %v2644 = vsel %vm2634, %v2385, %v2639
    %v2645 = vsel %vm2635, %v2387, %v2640
    %v2646 = vsel %vm2636, %v2508, %v2641
    %v2647 = vsel %vm2637, %v2510, %v2642
    %v2648 = vsel %vm2638, %v2629, %v2643
    %v2649 = vpack.c.bf16 %v2644, %v2644
    %v2650 = vpack.c.bf16 %v2645, %v2645
    %v2651 = vpack.c.bf16 %v2646, %v2646
    %v2652 = vpack.c.bf16 %v2647, %v2647
    %v2653 = vpack.c.bf16 %v2648, %v2648
    %v2654 = vld [vmem:[#allocation7 + $0x3] sm:$0x1]
    %v2655 = vld [vmem:[#allocation6] sm:$0xf]
    %v2656 = vld [vmem:[#allocation6 + $0x4] sm:$0xf]
    %v2657 = vld [vmem:[#allocation6 + $0x8] sm:$0xf]
    %v2658 = vld [vmem:[#allocation6 + $0xc] sm:$0xf]
    %v2659 = vld [vmem:[#allocation6 + $0x10] sm:$0xf]
    %v2660 = vld [vmem:[#allocation6 + $0x14] sm:$0xf]
    %v2661 = vld [vmem:[#allocation6 + $0x18] sm:$0xf]
    %v2662 = vld [vmem:[#allocation6 + $0x1c] sm:$0xf]
    %v2663 = vld [vmem:[#allocation6 + $0x20] sm:$0xf]
    %v2664 = vld [vmem:[#allocation6 + $0x24] sm:$0xf]
    %v2665 = vld [vmem:[#allocation6 + $0x28] sm:$0xf]
    %v2666 = vld [vmem:[#allocation6 + $0x2c] sm:$0xf]
    %v2667 = vld [vmem:[#allocation6 + $0x30] sm:$0xf]
    %v2668 = vld [vmem:[#allocation6 + $0x34] sm:$0xf]
    %v2669 = vld [vmem:[#allocation6 + $0x38] sm:$0xf]
    %v2670 = vld [vmem:[#allocation6 + $0x3c] sm:$0xf]
    %v2671 = vld [vmem:[#allocation6 + $0x40] sm:$0xf]
    %v2672 = vld [vmem:[#allocation6 + $0x44] sm:$0xf]
    %v2673 = vld [vmem:[#allocation6 + $0x48] sm:$0xf]
    %v2674 = vld [vmem:[#allocation6 + $0x4c] sm:$0xf]
    %v2675 = vld [vmem:[#allocation6 + $0x50] sm:$0xf]
    %v2676 = vld [vmem:[#allocation6 + $0x54] sm:$0xf]
    %v2677 = vld [vmem:[#allocation6 + $0x58] sm:$0xf]
    %v2678 = vld [vmem:[#allocation6 + $0x5c] sm:$0xf]
    %v2679 = vld [vmem:[#allocation6 + $0x60] sm:$0xf]
    %v2680 = vld [vmem:[#allocation6 + $0x64] sm:$0xf]
    %v2681 = vld [vmem:[#allocation6 + $0x68] sm:$0xf]
    %v2682 = vld [vmem:[#allocation6 + $0x6c] sm:$0xf]
    %v2683 = vld [vmem:[#allocation6 + $0x70] sm:$0xf]
    %v2684 = vld [vmem:[#allocation6 + $0x74] sm:$0xf]
    %v2685 = vld [vmem:[#allocation6 + $0x78] sm:$0xf]
    %v2686 = vld [vmem:[#allocation6 + $0x7c] sm:$0xf]
    %v2687 = vld [vmem:[#allocation6 + $0x80] sm:$0xf]
    %v2688 = vld [vmem:[#allocation6 + $0x84] sm:$0xf]
    %v2689 = vld [vmem:[#allocation6 + $0x88] sm:$0xf]
    %v2690 = vld [vmem:[#allocation6 + $0x8c] sm:$0xf]
    %v2691 = vld [vmem:[#allocation6 + $0x90] sm:$0xf]
    %v2692 = vld [vmem:[#allocation6 + $0x94] sm:$0xf]
    %v2693 = vld [vmem:[#allocation6 + $0x98] sm:$0xf]
    %v2694 = vld [vmem:[#allocation6 + $0x9c] sm:$0xf]
    %v2695 = vld [vmem:[#allocation6 + $0xa0] sm:$0xf]
    %v2696 = vld [vmem:[#allocation6 + $0xa4] sm:$0xf]
    %v2697 = vld [vmem:[#allocation6 + $0xa8] sm:$0xf]
    %v2698 = vld [vmem:[#allocation6 + $0xac] sm:$0xf]
    %v2699 = vld [vmem:[#allocation6 + $0xb0] sm:$0xf]
    %v2700 = vld [vmem:[#allocation6 + $0xb4] sm:$0xf]
    %v2701 = vld [vmem:[#allocation6 + $0xb8] sm:$0xf]
    %v2702 = vld [vmem:[#allocation6 + $0xbc] sm:$0xf]
    %v2703 = vld [vmem:[#allocation6 + $0xc0] sm:$0xf]
    %v2704 = vld [vmem:[#allocation6 + $0xc4] sm:$0xf]
    %v2705 = vld [vmem:[#allocation6 + $0xc8] sm:$0xf]
    %v2706 = vld [vmem:[#allocation6 + $0xcc] sm:$0xf]
    %v2707 = vld [vmem:[#allocation6 + $0xd0] sm:$0xf]
    %v2708 = vld [vmem:[#allocation6 + $0xd4] sm:$0xf]
    %v2709 = vld [vmem:[#allocation6 + $0xd8] sm:$0xf]
    %v2710 = vld [vmem:[#allocation6 + $0xdc] sm:$0xf]
    %v2711 = vld [vmem:[#allocation6 + $0xe0] sm:$0xf]
    %v2712 = vld [vmem:[#allocation6 + $0xe4] sm:$0xf]
    %v2713 = vld [vmem:[#allocation6 + $0xe8] sm:$0xf]
    %v2714 = vld [vmem:[#allocation6 + $0xec] sm:$0xf]
    %v2715 = vld [vmem:[#allocation6 + $0xf0] sm:$0xf]
    %v2716 = vld [vmem:[#allocation6 + $0xf4] sm:$0xf]
    %v2717 = vld [vmem:[#allocation6 + $0xf8] sm:$0xf]
    %v2718 = vld [vmem:[#allocation6 + $0xfc] sm:$0xf]
    %v2719 = vld [vmem:[#allocation6 + $0x100] sm:$0xf]
    %v2720 = vld [vmem:[#allocation6 + $0x104] sm:$0xf]
    %v2721 = vld [vmem:[#allocation6 + $0x108] sm:$0xf]
    %v2722 = vld [vmem:[#allocation6 + $0x10c] sm:$0xf]
    %v2723 = vld [vmem:[#allocation6 + $0x110] sm:$0xf]
    %v2724 = vld [vmem:[#allocation6 + $0x114] sm:$0xf]
    %v2725 = vld [vmem:[#allocation6 + $0x118] sm:$0xf]
    %v2726 = vld [vmem:[#allocation6 + $0x11c] sm:$0xf]
    %v2727 = vld [vmem:[#allocation6 + $0x120] sm:$0xf]
    %v2728 = vld [vmem:[#allocation6 + $0x124] sm:$0xf]
    %v2729 = vld [vmem:[#allocation6 + $0x128] sm:$0xf]
    %v2730 = vld [vmem:[#allocation6 + $0x12c] sm:$0xf]
    %v2731 = vld [vmem:[#allocation6 + $0x130] sm:$0xf]
    %v2732 = vld [vmem:[#allocation6 + $0x134] sm:$0xf]
    %v2733 = vld [vmem:[#allocation6 + $0x138] sm:$0xf]
    %v2734 = vld [vmem:[#allocation6 + $0x13c] sm:$0xf]
    %v2735 = vlaneseq
    %v2736 = vshrl.u32 %v2735, 7
    %v2737 = vsub.s32 0, %v2736
    %v2738 = vrot.slane %v2654, %v2737
    %v2819 = vunpack.c.l.b16 %v2655
    %v2820 = vunpack.c.l.b16 %v2656
    %v2821 = vunpack.c.l.b16 %v2657
    %v2822 = vunpack.c.l.b16 %v2658
    %v2823 = vunpack.c.l.b16 %v2659
    %v2824 = vunpack.c.l.b16 %v2660
    %v2825 = vunpack.c.l.b16 %v2661
    %v2826 = vunpack.c.l.b16 %v2662
    %v2827 = vunpack.c.l.b16 %v2663
    %v2828 = vunpack.c.l.b16 %v2664
    %v2829 = vunpack.c.l.b16 %v2665
    %v2830 = vunpack.c.l.b16 %v2666
    %v2831 = vunpack.c.l.b16 %v2667
    %v2832 = vunpack.c.l.b16 %v2668
    %v2833 = vunpack.c.l.b16 %v2669
    %v2834 = vunpack.c.l.b16 %v2670
    %v2835 = vunpack.c.l.b16 %v2671
    %v2836 = vunpack.c.l.b16 %v2672
    %v2837 = vunpack.c.l.b16 %v2673
    %v2838 = vunpack.c.l.b16 %v2674
    %v2839 = vunpack.c.l.b16 %v2675
    %v2840 = vunpack.c.l.b16 %v2676
    %v2841 = vunpack.c.l.b16 %v2677
    %v2842 = vunpack.c.l.b16 %v2678
    %v2843 = vunpack.c.l.b16 %v2679
    %v2844 = vunpack.c.l.b16 %v2680
    %v2845 = vunpack.c.l.b16 %v2681
    %v2846 = vunpack.c.l.b16 %v2682
    %v2847 = vunpack.c.l.b16 %v2683
    %v2848 = vunpack.c.l.b16 %v2684
    %v2849 = vunpack.c.l.b16 %v2685
    %v2850 = vunpack.c.l.b16 %v2686
    %v2851 = vunpack.c.l.b16 %v2687
    %v2852 = vunpack.c.l.b16 %v2688
    %v2853 = vunpack.c.l.b16 %v2689
    %v2854 = vunpack.c.l.b16 %v2690
    %v2855 = vunpack.c.l.b16 %v2691
    %v2856 = vunpack.c.l.b16 %v2692
    %v2857 = vunpack.c.l.b16 %v2693
    %v2858 = vunpack.c.l.b16 %v2694
    %v2859 = vunpack.c.l.b16 %v2695
    %v2860 = vunpack.c.l.b16 %v2696
    %v2861 = vunpack.c.l.b16 %v2697
    %v2862 = vunpack.c.l.b16 %v2698
    %v2863 = vunpack.c.l.b16 %v2699
    %v2864 = vunpack.c.l.b16 %v2700
    %v2865 = vunpack.c.l.b16 %v2701
    %v2866 = vunpack.c.l.b16 %v2702
    %v2867 = vunpack.c.l.b16 %v2703
    %v2868 = vunpack.c.l.b16 %v2704
    %v2869 = vunpack.c.l.b16 %v2705
    %v2870 = vunpack.c.l.b16 %v2706
    %v2871 = vunpack.c.l.b16 %v2707
    %v2872 = vunpack.c.l.b16 %v2708
    %v2873 = vunpack.c.l.b16 %v2709
    %v2874 = vunpack.c.l.b16 %v2710
    %v2875 = vunpack.c.l.b16 %v2711
    %v2876 = vunpack.c.l.b16 %v2712
    %v2877 = vunpack.c.l.b16 %v2713
    %v2878 = vunpack.c.l.b16 %v2714
    %v2879 = vunpack.c.l.b16 %v2715
    %v2880 = vunpack.c.l.b16 %v2716
    %v2881 = vunpack.c.l.b16 %v2717
    %v2882 = vunpack.c.l.b16 %v2718
    %v2883 = vunpack.c.l.b16 %v2719
    %v2884 = vunpack.c.l.b16 %v2720
    %v2885 = vunpack.c.l.b16 %v2721
    %v2886 = vunpack.c.l.b16 %v2722
    %v2887 = vunpack.c.l.b16 %v2723
    %v2888 = vunpack.c.l.b16 %v2724
    %v2889 = vunpack.c.l.b16 %v2725
    %v2890 = vunpack.c.l.b16 %v2726
    %v2891 = vunpack.c.l.b16 %v2727
    %v2892 = vunpack.c.l.b16 %v2728
    %v2893 = vunpack.c.l.b16 %v2729
    %v2894 = vunpack.c.l.b16 %v2730
    %v2895 = vunpack.c.l.b16 %v2731
    %v2896 = vunpack.c.l.b16 %v2732
    %v2897 = vunpack.c.l.b16 %v2733
    %v2898 = vunpack.c.l.b16 %v2734
    %v2899 = vpack.c.b16 %v2820, %v2819
    %v2900 = vpack.c.b16 %v2822, %v2821
    %v2901 = vpack.c.b16 %v2824, %v2823
    %v2902 = vpack.c.b16 %v2826, %v2825
    %v2903 = vpack.c.b16 %v2828, %v2827
    %v2904 = vpack.c.b16 %v2830, %v2829
    %v2905 = vpack.c.b16 %v2832, %v2831
    %v2906 = vpack.c.b16 %v2834, %v2833
    %v2907 = vpack.c.b16 %v2836, %v2835
    %v2908 = vpack.c.b16 %v2838, %v2837
    %v2909 = vpack.c.b16 %v2840, %v2839
    %v2910 = vpack.c.b16 %v2842, %v2841
    %v2911 = vpack.c.b16 %v2844, %v2843
    %v2912 = vpack.c.b16 %v2846, %v2845
    %v2913 = vpack.c.b16 %v2848, %v2847
    %v2914 = vpack.c.b16 %v2850, %v2849
    %v2915 = vpack.c.b16 %v2852, %v2851
    %v2916 = vpack.c.b16 %v2854, %v2853
    %v2917 = vpack.c.b16 %v2856, %v2855
    %v2918 = vpack.c.b16 %v2858, %v2857
    %v2919 = vpack.c.b16 %v2860, %v2859
    %v2920 = vpack.c.b16 %v2862, %v2861
    %v2921 = vpack.c.b16 %v2864, %v2863
    %v2922 = vpack.c.b16 %v2866, %v2865
    %v2923 = vpack.c.b16 %v2868, %v2867
    %v2924 = vpack.c.b16 %v2870, %v2869
    %v2925 = vpack.c.b16 %v2872, %v2871
    %v2926 = vpack.c.b16 %v2874, %v2873
    %v2927 = vpack.c.b16 %v2876, %v2875
    %v2928 = vpack.c.b16 %v2878, %v2877
    %v2929 = vpack.c.b16 %v2880, %v2879
    %v2930 = vpack.c.b16 %v2882, %v2881
    %v2931 = vpack.c.b16 %v2884, %v2883
    %v2932 = vpack.c.b16 %v2886, %v2885
    %v2933 = vpack.c.b16 %v2888, %v2887
    %v2934 = vpack.c.b16 %v2890, %v2889
    %v2935 = vpack.c.b16 %v2892, %v2891
    %v2936 = vpack.c.b16 %v2894, %v2893
    %v2937 = vpack.c.b16 %v2896, %v2895
    %v2938 = vpack.c.b16 %v2898, %v2897
    %2979 = vmatprep.subr.bf16.mxu0 0
    %2980 = vmatpush1.bf16.msra.mxu0 %v2899
    %2981 = vmatprep.subr.bf16.mxu0 0
    %2982 = vmatpush1.bf16.msra.mxu0 %v2900
    %2983 = vmatprep.subr.bf16.mxu0 0
    %2984 = vmatpush1.bf16.msra.mxu0 %v2901
    %2985 = vmatprep.subr.bf16.mxu0 0
    %2986 = vmatpush1.bf16.msra.mxu0 %v2902
    %2987 = vmatprep.subr.bf16.mxu0 0
    %2988 = vmatpush1.bf16.msra.mxu0 %v2903
    %2989 = vmatprep.subr.bf16.mxu0 0
    %2990 = vmatpush1.bf16.msra.mxu0 %v2904
    %2991 = vmatprep.subr.bf16.mxu0 0
    %2992 = vmatpush1.bf16.msra.mxu0 %v2905
    %2993 = vmatprep.subr.bf16.mxu0 0
    %2994 = vmatpush1.bf16.msra.mxu0 %v2906
    %2995 = vmatprep.subr.bf16.mxu0 0
    %2996 = vmatpush1.bf16.msra.mxu0 %v2907
    %2997 = vmatprep.subr.bf16.mxu0 0
    %2998 = vmatpush1.bf16.msra.mxu0 %v2908
    %2999 = vmatprep.subr.bf16.mxu0 0
    %3000 = vmatpush1.bf16.msra.mxu0 %v2909
    %3001 = vmatprep.subr.bf16.mxu0 0
    %3002 = vmatpush1.bf16.msra.mxu0 %v2910
    %3003 = vmatprep.subr.bf16.mxu0 0
    %3004 = vmatpush1.bf16.msra.mxu0 %v2911
    %3005 = vmatprep.subr.bf16.mxu0 0
    %3006 = vmatpush1.bf16.msra.mxu0 %v2912
    %3007 = vmatprep.subr.bf16.mxu0 0
    %3008 = vmatpush1.bf16.msra.mxu0 %v2913
    %3009 = vmatprep.subr.bf16.mxu0 0
    %3010 = vmatpush1.bf16.msra.mxu0 %v2914
    %3011 = vmatprep.mubr.bf16.mxu0 %v2650
    %3012 = vmatmul.mubr.bf16.gmra.mrb[0].mxu0 %v2649
    %v3013 = vpop.f32.mrb[0].mxu0
    %v3014 = vadd.f32 %v2738, %v3013
    %v3015 = vpop.f32.mrb[0].mxu0
    %v3016 = vpop.f32.mrb[0].mxu0
    %v3017 = vpop.f32.mrb[0].mxu0
    %3018 = vdwg.mxu0
    %3019 = vmatprep.subr.bf16.mxu0 0
    %3020 = vmatpush1.bf16.msra.mxu0 %v2915
    %3021 = vmatprep.subr.bf16.mxu0 0
    %3022 = vmatpush1.bf16.msra.mxu0 %v2916
    %3023 = vmatprep.subr.bf16.mxu0 0
    %3024 = vmatpush1.bf16.msra.mxu0 %v2917
    %3025 = vmatprep.subr.bf16.mxu0 0
    %3026 = vmatpush1.bf16.msra.mxu0 %v2918
    %3027 = vmatprep.subr.bf16.mxu0 0
    %3028 = vmatpush1.bf16.msra.mxu0 %v2919
    %3029 = vmatprep.subr.bf16.mxu0 0
    %3030 = vmatpush1.bf16.msra.mxu0 %v2920
    %3031 = vmatprep.subr.bf16.mxu0 0
    %3032 = vmatpush1.bf16.msra.mxu0 %v2921
    %3033 = vmatprep.subr.bf16.mxu0 0
    %3034 = vmatpush1.bf16.msra.mxu0 %v2922
    %3035 = vmatprep.subr.bf16.mxu0 0
    %3036 = vmatpush1.bf16.msra.mxu0 %v2923
    %3037 = vmatprep.subr.bf16.mxu0 0
    %3038 = vmatpush1.bf16.msra.mxu0 %v2924
    %3039 = vmatprep.subr.bf16.mxu0 0
    %3040 = vmatpush1.bf16.msra.mxu0 %v2925
    %3041 = vmatprep.subr.bf16.mxu0 0
    %3042 = vmatpush1.bf16.msra.mxu0 %v2926
    %3043 = vmatprep.subr.bf16.mxu0 0
    %3044 = vmatpush1.bf16.msra.mxu0 %v2927
    %3045 = vmatprep.subr.bf16.mxu0 0
    %3046 = vmatpush1.bf16.msra.mxu0 %v2928
    %3047 = vmatprep.subr.bf16.mxu0 0
    %3048 = vmatpush1.bf16.msra.mxu0 %v2929
    %3049 = vmatprep.subr.bf16.mxu0 0
    %3050 = vmatpush1.bf16.msra.mxu0 %v2930
    %3051 = vmatprep.mubr.bf16.mxu0 %v2652
    %3052 = vmatmul.mubr.bf16.gmra.mrb[0].mxu0 %v2651
    %v3053 = vpop.f32.mrb[0].mxu0
    %v3054 = vadd.f32 %v3014, %v3053
    %v3055 = vpop.f32.mrb[0].mxu0
    %v3056 = vpop.f32.mrb[0].mxu0
    %v3057 = vpop.f32.mrb[0].mxu0
    %3058 = vdwg.mxu0
    %3059 = vmatprep.subr.bf16.mxu0 0
    %3060 = vmatpush1.bf16.msra.mxu0 %v2931
    %3061 = vmatprep.subr.bf16.mxu0 0
    %3062 = vmatpush1.bf16.msra.mxu0 %v2932
    %3063 = vmatprep.subr.bf16.mxu0 0
    %3064 = vmatpush1.bf16.msra.mxu0 %v2933
    %3065 = vmatprep.subr.bf16.mxu0 0
    %3066 = vmatpush1.bf16.msra.mxu0 %v2934
    %3067 = vmatprep.subr.bf16.mxu0 0
    %3068 = vmatpush1.bf16.msra.mxu0 %v2935
    %3069 = vmatprep.subr.bf16.mxu0 0
    %3070 = vmatpush1.bf16.msra.mxu0 %v2936
    %3071 = vmatprep.subr.bf16.mxu0 0
    %3072 = vmatpush1.bf16.msra.mxu0 %v2937
    %3073 = vmatprep.subr.bf16.mxu0 0
    %3074 = vmatpush1.bf16.msra.mxu0 %v2938
    %3075 = vmatprep.subr.bf16.mxu0 0
    %3076 = vmatpush1.bf16.msra.mxu0 0
    %3077 = vmatprep.subr.bf16.mxu0 0
    %3078 = vmatpush1.bf16.msra.mxu0 0
    %3079 = vmatprep.subr.bf16.mxu0 0
    %3080 = vmatpush1.bf16.msra.mxu0 0
    %3081 = vmatprep.subr.bf16.mxu0 0
    %3082 = vmatpush1.bf16.msra.mxu0 0
    %3083 = vmatprep.subr.bf16.mxu0 0
    %3084 = vmatpush1.bf16.msra.mxu0 0
    %3085 = vmatprep.subr.bf16.mxu0 0
    %3086 = vmatpush1.bf16.msra.mxu0 0
    %3087 = vmatprep.subr.bf16.mxu0 0
    %3088 = vmatpush1.bf16.msra.mxu0 0
    %3089 = vmatprep.subr.bf16.mxu0 0
    %3090 = vmatpush1.bf16.msra.mxu0 0
    %3091 = vmatprep.mubr.bf16.mxu0 0
    %3092 = vmatmul.mubr.bf16.gmra.mrb[0].mxu0 %v2653
    %v3093 = vpop.f32.mrb[0].mxu0
    %v3094 = vadd.f32 %v3054, %v3093
    %v3095 = vpop.f32.mrb[0].mxu0
    %v3096 = vpop.f32.mrb[0].mxu0
    %v3097 = vpop.f32.mrb[0].mxu0
    %3098 = vdwg.mxu0
    %3099 = vst [vmem:[%s6] sm:$0xff] %v3094
    // Predicated region
    $region42: #{teacher_forward.1} parent=1 // pred_check
      _
    $region43: #{teacher_forward.1} parent=1 // pred_check_branch
      %3101 = sbr.rel (0) target = $region45
    $region44: #{teacher_forward.1} parent=1 // pred_region
      _
    $region45: #{teacher_forward.1} parent=1 // pred_fallthru
      _
    // Predicated region
    $region46: #{teacher_forward.1} parent=1 // pred_check
      _
    $region47: #{teacher_forward.1} parent=1 // pred_check_branch
      %3103 = sbr.rel (0) target = $region49
    $region48: #{teacher_forward.1} parent=1 // pred_region
      _
    $region49: #{teacher_forward.1} parent=1 // pred_fallthru
      _
    %3104 = vsyncpa [#allocation3], 1
    %3105 = vsyncpa [#allocation5], 1
    %3106 = vsyncpa [#allocation8], 1

</llo_original>
